<compile_context>
chip_gen: v7x
topology: tpu7x:2x2x1
jax: 0.10.0
libtpu: 0.0.40
codegen_flags: <defaults>
</compile_context>

<pallas_src>
import functools
import numpy as np
import jax
import jax.numpy as jnp
from jax import lax
from jax.experimental import pallas as pl
from jax.experimental.pallas import tpu as pltpu

LN_EPS = 1e-5                        # GPT2 layer_norm_epsilon
GELU_C = float(np.sqrt(2.0 / np.pi))
NEG_INF = -1e30                      # large-but-safe additive mask value


# ------------------------------ kernel helpers -------------------------------

def _ln(x, g, b):
    mu = jnp.mean(x, axis=-1, keepdims=True)
    var = jnp.mean(jnp.square(x - mu), axis=-1, keepdims=True)
    return (x - mu) * lax.rsqrt(var + LN_EPS) * g + b


def _gelu_new(x):
    # GPT2 "gelu_new" (tanh approximation)
    return 0.5 * x * (1.0 + jnp.tanh(GELU_C * (x + 0.044715 * x * x * x)))


# ------------------------------ Pallas kernels -------------------------------

def _embed_kernel(zs_ref, w_ref, b_ref, wpe_ref, o_ref):
    # read_in linear + positional embedding, fused.
    o_ref[...] = (jnp.dot(zs_ref[...], w_ref[...],
                          preferred_element_type=jnp.float32)
                  + b_ref[...] + wpe_ref[...])


def embed(zs, w, b, wpe_slab):
    M = zs.shape[0]
    D = w.shape[1]
    return pl.pallas_call(
        _embed_kernel,
        out_shape=jax.ShapeDtypeStruct((M, D), jnp.float32),
    )(zs, w, b.reshape(1, D), wpe_slab)


def _block_kernel(h_ref, bias_ref, ln1g_ref, ln1b_ref, attw_ref, attb_ref,
                  projw_ref, projb_ref, ln2g_ref, ln2b_ref,
                  fcw_ref, fcb_ref, fpw_ref, fpb_ref,
                  o_ref, qkv_s, *, n_head):
    x = h_ref[...]                               # (M, D), resident in VMEM
    D = x.shape[-1]
    dh = D // n_head
    scale = 1.0 / float(np.sqrt(dh))

    # ---- attention: LN1 -> fused QKV matmul -> per-head masked softmax ----
    ln1 = _ln(x, ln1g_ref[...], ln1b_ref[...])
    qkv_s[...] = (jnp.dot(ln1, attw_ref[...], preferred_element_type=jnp.float32)
                  + attb_ref[...])               # (M, 3D) staged in VMEM scratch
    bias = bias_ref[...]                         # causal & same-sequence additive mask
    attn = projb_ref[...]                        # (1, D) bias, broadcasts to (M, D)
    for hh in range(n_head):                     # heads unrolled (static)
        lo = hh * dh
        qh = qkv_s[:, lo:lo + dh]
        kh = qkv_s[:, D + lo:D + lo + dh]
        vh = qkv_s[:, 2 * D + lo:2 * D + lo + dh]
        s = lax.dot_general(qh, kh, (((1,), (1,)), ((), ())),
                            preferred_element_type=jnp.float32) * scale + bias
        m = jnp.max(s, axis=-1, keepdims=True)
        e = jnp.exp(s - m)
        p = e * pl.reciprocal(jnp.sum(e, axis=-1, keepdims=True), approx=True)
        oh = jnp.dot(p, vh, preferred_element_type=jnp.float32)          # (M, dh)
        # head merge + output projection folded into per-head matmuls
        attn = attn + jnp.dot(oh, projw_ref[lo:lo + dh, :],
                              preferred_element_type=jnp.float32)
    h1 = x + attn

    # ---- MLP: LN2 -> fc -> gelu_new -> proj, residual ----
    ln2 = _ln(h1, ln2g_ref[...], ln2b_ref[...])
    ff = (jnp.dot(ln2, fcw_ref[...], preferred_element_type=jnp.float32)
          + fcb_ref[...])
    ff = _gelu_new(ff)
    o_ref[...] = h1 + (jnp.dot(ff, fpw_ref[...], preferred_element_type=jnp.float32)
                       + fpb_ref[...])


def transformer_block(h, bias, blk, *, n_head):
    M, D = h.shape
    Dff = blk['fc_w'].shape[1]
    return pl.pallas_call(
        functools.partial(_block_kernel, n_head=n_head),
        out_shape=jax.ShapeDtypeStruct((M, D), jnp.float32),
        scratch_shapes=[pltpu.VMEM((M, 3 * D), jnp.float32)],
    )(h, bias,
      blk['ln1_g'].reshape(1, D), blk['ln1_b'].reshape(1, D),
      blk['attn_w'], blk['attn_b'].reshape(1, 3 * D),
      blk['attn_proj_w'], blk['attn_proj_b'].reshape(1, D),
      blk['ln2_g'].reshape(1, D), blk['ln2_b'].reshape(1, D),
      blk['fc_w'], blk['fc_b'].reshape(1, Dff),
      blk['proj_w'], blk['proj_b'].reshape(1, D))


def _head_kernel(h_ref, g_ref, b_ref, w_ref, hb_ref, o_ref):
    # final layernorm + fused (lane-padded) policy|value head
    x = _ln(h_ref[...], g_ref[...], b_ref[...])
    o_ref[...] = (jnp.dot(x, w_ref[...], preferred_element_type=jnp.float32)
                  + hb_ref[...])


def fused_heads(h, lnf_g, lnf_b, head_w, head_b):
    M, D = h.shape
    NP = head_w.shape[1]
    return pl.pallas_call(
        _head_kernel,
        out_shape=jax.ShapeDtypeStruct((M, NP), jnp.float32),
    )(h, lnf_g.reshape(1, D), lnf_b.reshape(1, D), head_w, head_b.reshape(1, NP))


def _symmetry_kernel(pol_ref, val_ref, pol_out, val_out, var_out, *, n_shifts):
    # pol_ref: (S, B, T, A) pre-rolled policy logits; val_ref: (S, B, T, 1).
    S = n_shifts
    inv_s = 1.0 / S
    ps = [pol_ref[sh] for sh in range(S)]
    pol_out[...] = sum(ps) * inv_s
    val_out[...] = sum(val_ref[sh] for sh in range(S)) * inv_s
    # variance over shifts of log(softmax(x)), computed as a stable log-softmax
    # (matches the reference softmax->log, population variance /S).
    lps = []
    for p in ps:
        z = p - jnp.max(p, axis=-1, keepdims=True)
        lps.append(z - jnp.log(jnp.sum(jnp.exp(z), axis=-1, keepdims=True)))
    mean_lp = sum(lps) * inv_s
    var_out[...] = sum(jnp.square(lp - mean_lp) for lp in lps) * inv_s


def symmetry_outputs(rolled_policies, values, *, n_arms):
    S, B, T, A = rolled_policies.shape
    return pl.pallas_call(
        functools.partial(_symmetry_kernel, n_shifts=n_arms),
        out_shape=(jax.ShapeDtypeStruct((B, T, A), jnp.float32),
                   jax.ShapeDtypeStruct((B, T, 1), jnp.float32),
                   jax.ShapeDtypeStruct((B, T, A), jnp.float32)),
    )(rolled_policies, values)


# ------------------------------- model (glue) --------------------------------

def _attention_bias(batch, seq):
    """(M, M) additive mask: 0 where (same sequence AND key_pos <= query_pos)."""
    idx = np.arange(batch * seq)
    same_seq = (idx[:, None] // seq) == (idx[None, :] // seq)
    causal = (idx[None, :] % seq) <= (idx[:, None] % seq)
    return jnp.asarray(np.where(same_seq & causal, 0.0, NEG_INF), dtype=jnp.float32)


def transformer_model_reg_forward(params, actions, rewards, *, n_arms, n_head,
                                  symmetric_pass=False):
    assert jnp.issubdtype(actions.dtype, jnp.integer), f'actions.dtype = {actions.dtype}'
    B, T, _ = actions.shape
    if symmetric_pass:
        all_actions = jnp.concatenate(
            [(actions + sh) % n_arms for sh in range(n_arms)], axis=0)
        all_rewards = jnp.concatenate([rewards] * n_arms, axis=0)
    else:
        all_actions, all_rewards = actions, rewards

    # _combine: stack((a, r), axis=2).squeeze(3).view(B, T, 2) == concat last axis.
    zs = jnp.concatenate([all_actions.astype(jnp.float32),
                          all_rewards.astype(jnp.float32)], axis=-1)
    Btot = zs.shape[0]
    D = params['read_in_w'].shape[1]
    M = Btot * T

    wpe_slab = jnp.tile(params['wpe'][:T], (Btot, 1))     # (M, D) per-token pos emb
    bias = _attention_bias(Btot, T)                       # (M, M) additive mask

    h = embed(zs.reshape(M, 2), params['read_in_w'], params['read_in_b'], wpe_slab)
    for blk in params['blocks']:
        h = transformer_block(h, bias, blk, n_head=n_head)

    logits = fused_heads(h, params['lnf_g'], params['lnf_b'],
                         params['head_w'], params['head_b'])        # (M, 128)
    policy = logits[:, :n_arms].reshape(Btot, T, n_arms)
    value = logits[:, n_arms:n_arms + 1].reshape(Btot, T, 1)

    if not symmetric_pass:
        return {'policy': policy, 'value': value, 'past_key_values': None}

    # Pre-roll each shift's policy slice (tiny XLA op), then fuse averaging +
    # log-softmax variance in one kernel.
    rolled = jnp.stack(
        [jnp.roll(policy[sh * B:(sh + 1) * B], shift=-sh, axis=-1)
         for sh in range(n_arms)], axis=0)                 # (S, B, T, A)
    vals = value.reshape(n_arms, B, T, 1)
    policy_out, value_out, sym_var = symmetry_outputs(rolled, vals, n_arms=n_arms)
    return {'policy': policy_out, 'value': value_out,
            'symmetry_variance': sym_var, 'past_key_values': None}


# ------------------------------ parameter init --------------------------------

def init_params(key, *, n_embd, n_layer, n_head, n_arms, n_dims, max_len):
    assert n_embd % n_head == 0
    state = {'key': key}

    def dense(shape):
        state['key'], sub = jax.random.split(state['key'])
        return (0.02 * jax.random.normal(sub, shape)).astype(jnp.float32)

    D = n_embd
    policy_w = dense((D, n_arms))
    value_w = dense((D, 1))
    # Fused, zero-padded (multiple of 128 lanes) policy|value read-out head so the
    # output store is lane-dense; sliced back apart in the wrapper.
    n_pad = max(128, ((n_arms + 1 + 127) // 128) * 128)
    head_w = jnp.zeros((D, n_pad), jnp.float32)
    head_w = head_w.at[:, :n_arms].set(policy_w)
    head_w = head_w.at[:, n_arms:n_arms + 1].set(value_w)
    head_b = jnp.zeros((n_pad,), jnp.float32)   # both head biases initialize to zero

    params = {
        'read_in_w': dense((n_dims, D)),
        'read_in_b': jnp.zeros((D,), jnp.float32),
        'wpe': dense((max_len, D)),
        'blocks': [],
        'lnf_g': jnp.ones((D,), jnp.float32),
        'lnf_b': jnp.zeros((D,), jnp.float32),
        'head_w': head_w,
        'head_b': head_b,
    }
    for _ in range(n_layer):
        params['blocks'].append({
            'ln1_g': jnp.ones((D,), jnp.float32),
            'ln1_b': jnp.zeros((D,), jnp.float32),
            'attn_w': dense((D, 3 * D)),
            'attn_b': jnp.zeros((3 * D,), jnp.float32),
            'attn_proj_w': dense((D, D)),
            'attn_proj_b': jnp.zeros((D,), jnp.float32),
            'ln2_g': jnp.ones((D,), jnp.float32),
            'ln2_b': jnp.zeros((D,), jnp.float32),
            'fc_w': dense((D, 4 * D)),
            'fc_b': jnp.zeros((4 * D,), jnp.float32),
            'proj_w': dense((4 * D, D)),
            'proj_b': jnp.zeros((D,), jnp.float32),
        })
    return params


# ----------------------------------- main --------------------------------------

if __name__ == "__main__":
    args = dict(n_embd=32, n_layer=2, n_head=4, n_arms=4, use_cache=False)
    n_dims = 2
    B, T = 2, 8

    key = jax.random.PRNGKey(0)
    pkey, akey, rkey = jax.random.split(key, 3)
    params = init_params(pkey, n_embd=args['n_embd'], n_layer=args['n_layer'],
                         n_head=args['n_head'], n_arms=args['n_arms'],
                         n_dims=n_dims, max_len=128)

    actions = jax.random.randint(akey, (B, T, 1), 0, args['n_arms'], dtype=jnp.int32)
    rewards = jax.random.uniform(rkey, (B, T, 1), dtype=jnp.float32)

    fwd = functools.partial(transformer_model_reg_forward,
                            n_arms=args['n_arms'], n_head=args['n_head'])
    fwd_jit = jax.jit(fwd, static_argnames=('symmetric_pass',))

    out_plain = fwd_jit(params, actions, rewards, symmetric_pass=False)
    out_sym = fwd_jit(params, actions, rewards, symmetric_pass=True)
    jax.block_until_ready((out_plain, out_sym))

    assert out_plain['policy'].shape == (B, T, args['n_arms'])
    assert out_plain['value'].shape == (B, T, 1)
    assert out_sym['policy'].shape == (B, T, args['n_arms'])
    assert out_sym['value'].shape == (B, T, 1)
    assert out_sym['symmetry_variance'].shape == (B, T, args['n_arms'])
    assert bool(jnp.all(jnp.isfinite(out_plain['policy'])))
    assert bool(jnp.all(jnp.isfinite(out_sym['policy'])))
    assert bool(jnp.all(out_sym['symmetry_variance'] >= 0))
    print("KERNEL_OK")
</pallas_src>

<mosaic_0001>
module attributes {stable_mosaic.version = 11 : i64} {
  func.func @_embed_kernel(%arg0: memref<16x2xf32, #tpu.memory_space<vmem>>, %arg1: memref<2x32xf32, #tpu.memory_space<vmem>>, %arg2: memref<1x32xf32, #tpu.memory_space<vmem>>, %arg3: memref<16x32xf32, #tpu.memory_space<vmem>>, %arg4: memref<16x32xf32, #tpu.memory_space<vmem>>) attributes {dimension_semantics = [], scalar_prefetch = 0 : i64, scratch_operands = 0 : i64, tpu.core_type = #tpu.core_type<tc>} {
    %c0 = arith.constant 0 : index
    %c0_0 = arith.constant 0 : index
    %0 = vector.load %arg0[%c0, %c0_0] : memref<16x2xf32, #tpu.memory_space<vmem>>, vector<16x2xf32>
    %c0_1 = arith.constant 0 : index
    %c0_2 = arith.constant 0 : index
    %1 = vector.load %arg1[%c0_1, %c0_2] : memref<2x32xf32, #tpu.memory_space<vmem>>, vector<2x32xf32>
    %cst = arith.constant dense<0.000000e+00> : vector<16x32xf32>
    %2 = tpu.matmul %0, %1, %cst {dimension_numbers = #tpu.dot_dimension_numbers<[1], [0], [0], [1], [0, 0, 1, 1], [], []>} : vector<16x2xf32>, vector<2x32xf32>, vector<16x32xf32> -> vector<16x32xf32>
    %c0_3 = arith.constant 0 : index
    %c0_4 = arith.constant 0 : index
    %3 = vector.load %arg2[%c0_3, %c0_4] : memref<1x32xf32, #tpu.memory_space<vmem>>, vector<1x32xf32>
    %4 = vector.broadcast %3 : vector<1x32xf32> to vector<16x32xf32>
    %5 = arith.addf %2, %4 : vector<16x32xf32>
    %c0_5 = arith.constant 0 : index
    %c0_6 = arith.constant 0 : index
    %6 = vector.load %arg3[%c0_5, %c0_6] : memref<16x32xf32, #tpu.memory_space<vmem>>, vector<16x32xf32>
    %7 = arith.addf %5, %6 : vector<16x32xf32>
    %c0_7 = arith.constant 0 : index
    %c0_8 = arith.constant 0 : index
    %8 = vector.load %arg4[%c0_7, %c0_8] : memref<16x32xf32, #tpu.memory_space<vmem>>, vector<16x32xf32>
    tpu.vector_store %arg4[%c0_7, %c0_8], %7 {strides = array<i32>} : memref<16x32xf32, #tpu.memory_space<vmem>>, vector<16x32xf32>,
    return
  }
}

module attributes {stable_mosaic.version = 11 : i64} {
  func.func @_head_kernel(%arg0: memref<16x32xf32, #tpu.memory_space<vmem>>, %arg1: memref<1x32xf32, #tpu.memory_space<vmem>>, %arg2: memref<1x32xf32, #tpu.memory_space<vmem>>, %arg3: memref<32x128xf32, #tpu.memory_space<vmem>>, %arg4: memref<1x128xf32, #tpu.memory_space<vmem>>, %arg5: memref<16x128xf32, #tpu.memory_space<vmem>>) attributes {dimension_semantics = [], scalar_prefetch = 0 : i64, scratch_operands = 0 : i64, tpu.core_type = #tpu.core_type<tc>} {
    %c0 = arith.constant 0 : index
    %c0_0 = arith.constant 0 : index
    %0 = vector.load %arg0[%c0, %c0_0] : memref<16x32xf32, #tpu.memory_space<vmem>>, vector<16x32xf32>
    %c0_1 = arith.constant 0 : index
    %c0_2 = arith.constant 0 : index
    %1 = vector.load %arg1[%c0_1, %c0_2] : memref<1x32xf32, #tpu.memory_space<vmem>>, vector<1x32xf32>
    %c0_3 = arith.constant 0 : index
    %c0_4 = arith.constant 0 : index
    %2 = vector.load %arg2[%c0_3, %c0_4] : memref<1x32xf32, #tpu.memory_space<vmem>>, vector<1x32xf32>
    %cst = arith.constant dense<0.000000e+00> : vector<16xf32>
    %3 = vector.multi_reduction <add>, %0, %cst [1] : vector<16x32xf32> to vector<16xf32>
    %4 = vector.shape_cast %3 : vector<16xf32> to vector<16x1xf32>
    %cst_5 = arith.constant 3.200000e+01 : f32
    %5 = vector.broadcast %cst_5 : f32 to vector<16x1xf32>
    %6 = arith.divf %4, %5 : vector<16x1xf32>
    %7 = vector.broadcast %6 : vector<16x1xf32> to vector<16x32xf32>
    %8 = arith.subf %0, %7 : vector<16x32xf32>
    %9 = arith.mulf %8, %8 : vector<16x32xf32>
    %cst_6 = arith.constant dense<0.000000e+00> : vector<16xf32>
    %10 = vector.multi_reduction <add>, %9, %cst_6 [1] : vector<16x32xf32> to vector<16xf32>
    %11 = vector.shape_cast %10 : vector<16xf32> to vector<16x1xf32>
    %cst_7 = arith.constant 3.200000e+01 : f32
    %12 = vector.broadcast %cst_7 : f32 to vector<16x1xf32>
    %13 = arith.divf %11, %12 : vector<16x1xf32>
    %14 = vector.broadcast %6 : vector<16x1xf32> to vector<16x32xf32>
    %15 = arith.subf %0, %14 : vector<16x32xf32>
    %cst_8 = arith.constant 9.99999974E-6 : f32
    %16 = vector.broadcast %cst_8 : f32 to vector<16x1xf32>
    %17 = arith.addf %13, %16 : vector<16x1xf32>
    %18 = math.rsqrt %17 : vector<16x1xf32>
    %19 = vector.broadcast %18 : vector<16x1xf32> to vector<16x32xf32>
    %20 = arith.mulf %15, %19 : vector<16x32xf32>
    %21 = vector.broadcast %1 : vector<1x32xf32> to vector<16x32xf32>
    %22 = arith.mulf %20, %21 : vector<16x32xf32>
    %23 = vector.broadcast %2 : vector<1x32xf32> to vector<16x32xf32>
    %24 = arith.addf %22, %23 : vector<16x32xf32>
    %c0_9 = arith.constant 0 : index
    %c0_10 = arith.constant 0 : index
    %25 = vector.load %arg3[%c0_9, %c0_10] : memref<32x128xf32, #tpu.memory_space<vmem>>, vector<32x128xf32>
    %cst_11 = arith.constant dense<0.000000e+00> : vector<16x128xf32>
    %26 = tpu.matmul %24, %25, %cst_11 {dimension_numbers = #tpu.dot_dimension_numbers<[1], [0], [0], [1], [0, 0, 1, 1], [], []>} : vector<16x32xf32>, vector<32x128xf32>, vector<16x128xf32> -> vector<16x128xf32>
    %c0_12 = arith.constant 0 : index
    %c0_13 = arith.constant 0 : index
    %27 = vector.load %arg4[%c0_12, %c0_13] : memref<1x128xf32, #tpu.memory_space<vmem>>, vector<1x128xf32>
    %28 = vector.broadcast %27 : vector<1x128xf32> to vector<16x128xf32>
    %29 = arith.addf %26, %28 : vector<16x128xf32>
    %c0_14 = arith.constant 0 : index
    %c0_15 = arith.constant 0 : index
    %30 = vector.load %arg5[%c0_14, %c0_15] : memref<16x128xf32, #tpu.memory_space<vmem>>, vector<16x128xf32>
    tpu.vector_store %arg5[%c0_14, %c0_15], %29 {strides = array<i32>} : memref<16x128xf32, #tpu.memory_space<vmem>>, vector<16x128xf32>,
    return
  }
}

module attributes {stable_mosaic.version = 11 : i64} {
  func.func @_block_kernel(%arg0: memref<16x32xf32, #tpu.memory_space<vmem>>, %arg1: memref<16x16xf32, #tpu.memory_space<vmem>>, %arg2: memref<1x32xf32, #tpu.memory_space<vmem>>, %arg3: memref<1x32xf32, #tpu.memory_space<vmem>>, %arg4: memref<32x96xf32, #tpu.memory_space<vmem>>, %arg5: memref<1x96xf32, #tpu.memory_space<vmem>>, %arg6: memref<32x32xf32, #tpu.memory_space<vmem>>, %arg7: memref<1x32xf32, #tpu.memory_space<vmem>>, %arg8: memref<1x32xf32, #tpu.memory_space<vmem>>, %arg9: memref<1x32xf32, #tpu.memory_space<vmem>>, %arg10: memref<32x128xf32, #tpu.memory_space<vmem>>, %arg11: memref<1x128xf32, #tpu.memory_space<vmem>>, %arg12: memref<128x32xf32, #tpu.memory_space<vmem>>, %arg13: memref<1x32xf32, #tpu.memory_space<vmem>>, %arg14: memref<16x32xf32, #tpu.memory_space<vmem>>, %arg15: memref<16x96xf32, #tpu.memory_space<vmem>>) attributes {dimension_semantics = [], scalar_prefetch = 0 : i64, scratch_operands = 1 : i64, tpu.core_type = #tpu.core_type<tc>} {
    %c0 = arith.constant 0 : index
    %c0_0 = arith.constant 0 : index
    %0 = vector.load %arg0[%c0, %c0_0] : memref<16x32xf32, #tpu.memory_space<vmem>>, vector<16x32xf32>
    %c0_1 = arith.constant 0 : index
    %c0_2 = arith.constant 0 : index
    %1 = vector.load %arg2[%c0_1, %c0_2] : memref<1x32xf32, #tpu.memory_space<vmem>>, vector<1x32xf32>
    %c0_3 = arith.constant 0 : index
    %c0_4 = arith.constant 0 : index
    %2 = vector.load %arg3[%c0_3, %c0_4] : memref<1x32xf32, #tpu.memory_space<vmem>>, vector<1x32xf32>
    %cst = arith.constant dense<0.000000e+00> : vector<16xf32>
    %3 = vector.multi_reduction <add>, %0, %cst [1] : vector<16x32xf32> to vector<16xf32>
    %4 = vector.shape_cast %3 : vector<16xf32> to vector<16x1xf32>
    %cst_5 = arith.constant 3.200000e+01 : f32
    %5 = vector.broadcast %cst_5 : f32 to vector<16x1xf32>
    %6 = arith.divf %4, %5 : vector<16x1xf32>
    %7 = vector.broadcast %6 : vector<16x1xf32> to vector<16x32xf32>
    %8 = arith.subf %0, %7 : vector<16x32xf32>
    %9 = arith.mulf %8, %8 : vector<16x32xf32>
    %cst_6 = arith.constant dense<0.000000e+00> : vector<16xf32>
    %10 = vector.multi_reduction <add>, %9, %cst_6 [1] : vector<16x32xf32> to vector<16xf32>
    %11 = vector.shape_cast %10 : vector<16xf32> to vector<16x1xf32>
    %cst_7 = arith.constant 3.200000e+01 : f32
    %12 = vector.broadcast %cst_7 : f32 to vector<16x1xf32>
    %13 = arith.divf %11, %12 : vector<16x1xf32>
    %14 = vector.broadcast %6 : vector<16x1xf32> to vector<16x32xf32>
    %15 = arith.subf %0, %14 : vector<16x32xf32>
    %cst_8 = arith.constant 9.99999974E-6 : f32
    %16 = vector.broadcast %cst_8 : f32 to vector<16x1xf32>
    %17 = arith.addf %13, %16 : vector<16x1xf32>
    %18 = math.rsqrt %17 : vector<16x1xf32>
    %19 = vector.broadcast %18 : vector<16x1xf32> to vector<16x32xf32>
    %20 = arith.mulf %15, %19 : vector<16x32xf32>
    %21 = vector.broadcast %1 : vector<1x32xf32> to vector<16x32xf32>
    %22 = arith.mulf %20, %21 : vector<16x32xf32>
    %23 = vector.broadcast %2 : vector<1x32xf32> to vector<16x32xf32>
    %24 = arith.addf %22, %23 : vector<16x32xf32>
    %c0_9 = arith.constant 0 : index
    %c0_10 = arith.constant 0 : index
    %25 = vector.load %arg4[%c0_9, %c0_10] : memref<32x96xf32, #tpu.memory_space<vmem>>, vector<32x96xf32>
    %cst_11 = arith.constant dense<0.000000e+00> : vector<16x96xf32>
    %26 = tpu.matmul %24, %25, %cst_11 {dimension_numbers = #tpu.dot_dimension_numbers<[1], [0], [0], [1], [0, 0, 1, 1], [], []>} : vector<16x32xf32>, vector<32x96xf32>, vector<16x96xf32> -> vector<16x96xf32>
    %c0_12 = arith.constant 0 : index
    %c0_13 = arith.constant 0 : index
    %27 = vector.load %arg5[%c0_12, %c0_13] : memref<1x96xf32, #tpu.memory_space<vmem>>, vector<1x96xf32>
    %28 = vector.broadcast %27 : vector<1x96xf32> to vector<16x96xf32>
    %29 = arith.addf %26, %28 : vector<16x96xf32>
    %c0_14 = arith.constant 0 : index
    %c0_15 = arith.constant 0 : index
    %30 = vector.load %arg15[%c0_14, %c0_15] : memref<16x96xf32, #tpu.memory_space<vmem>>, vector<16x96xf32>
    tpu.vector_store %arg15[%c0_14, %c0_15], %29 {strides = array<i32>} : memref<16x96xf32, #tpu.memory_space<vmem>>, vector<16x96xf32>,
    %c0_16 = arith.constant 0 : index
    %c0_17 = arith.constant 0 : index
    %31 = vector.load %arg1[%c0_16, %c0_17] : memref<16x16xf32, #tpu.memory_space<vmem>>, vector<16x16xf32>
    %c0_18 = arith.constant 0 : index
    %c0_19 = arith.constant 0 : index
    %32 = vector.load %arg7[%c0_18, %c0_19] : memref<1x32xf32, #tpu.memory_space<vmem>>, vector<1x32xf32>
    %c0_20 = arith.constant 0 : index
    %c0_21 = arith.constant 0 : index
    %33 = vector.load %arg15[%c0_20, %c0_21] : memref<16x96xf32, #tpu.memory_space<vmem>>, vector<16x8xf32>
    %c0_22 = arith.constant 0 : index
    %c32 = arith.constant 32 : index
    %34 = vector.load %arg15[%c0_22, %c32] : memref<16x96xf32, #tpu.memory_space<vmem>>, vector<16x8xf32>
    %c0_23 = arith.constant 0 : index
    %c64 = arith.constant 64 : index
    %35 = vector.load %arg15[%c0_23, %c64] : memref<16x96xf32, #tpu.memory_space<vmem>>, vector<16x8xf32>
    %cst_24 = arith.constant dense<0.000000e+00> : vector<16x16xf32>
    %36 = tpu.matmul %33, %34, %cst_24 {dimension_numbers = #tpu.dot_dimension_numbers<[1], [1], [0], [0], [0, 0, 1, 0], [], []>} : vector<16x8xf32>, vector<16x8xf32>, vector<16x16xf32> -> vector<16x16xf32>
    %cst_25 = arith.constant 0.353553385 : f32
    %37 = vector.broadcast %cst_25 : f32 to vector<16x16xf32>
    %38 = arith.mulf %36, %37 : vector<16x16xf32>
    %39 = arith.addf %38, %31 : vector<16x16xf32>
    %cst_26 = arith.constant dense<0xFF800000> : vector<16xf32>
    %40 = vector.multi_reduction <maximumf>, %39, %cst_26 [1] : vector<16x16xf32> to vector<16xf32>
    %41 = vector.shape_cast %40 : vector<16xf32> to vector<16x1xf32>
    %42 = vector.broadcast %41 : vector<16x1xf32> to vector<16x16xf32>
    %43 = arith.subf %39, %42 : vector<16x16xf32>
    %44 = math.exp %43 : vector<16x16xf32>
    %cst_27 = arith.constant dense<0.000000e+00> : vector<16xf32>
    %45 = vector.multi_reduction <add>, %44, %cst_27 [1] : vector<16x16xf32> to vector<16xf32>
    %46 = vector.shape_cast %45 : vector<16xf32> to vector<16x1xf32>
    %47 = tpu.reciprocal %46 {approx = true} : vector<16x1xf32> -> vector<16x1xf32>
    %48 = vector.broadcast %47 : vector<16x1xf32> to vector<16x16xf32>
    %49 = arith.mulf %44, %48 : vector<16x16xf32>
    %cst_28 = arith.constant dense<0.000000e+00> : vector<16x8xf32>
    %50 = tpu.matmul %49, %35, %cst_28 {dimension_numbers = #tpu.dot_dimension_numbers<[1], [0], [0], [1], [0, 0, 1, 1], [], []>} : vector<16x16xf32>, vector<16x8xf32>, vector<16x8xf32> -> vector<16x8xf32>
    %c0_29 = arith.constant 0 : index
    %c0_30 = arith.constant 0 : index
    %51 = vector.load %arg6[%c0_29, %c0_30] : memref<32x32xf32, #tpu.memory_space<vmem>>, vector<8x32xf32>
    %cst_31 = arith.constant dense<0.000000e+00> : vector<16x32xf32>
    %52 = tpu.matmul %50, %51, %cst_31 {dimension_numbers = #tpu.dot_dimension_numbers<[1], [0], [0], [1], [0, 0, 1, 1], [], []>} : vector<16x8xf32>, vector<8x32xf32>, vector<16x32xf32> -> vector<16x32xf32>
    %53 = vector.broadcast %32 : vector<1x32xf32> to vector<16x32xf32>
    %54 = arith.addf %53, %52 : vector<16x32xf32>
    %c0_32 = arith.constant 0 : index
    %c8 = arith.constant 8 : index
    %55 = vector.load %arg15[%c0_32, %c8] : memref<16x96xf32, #tpu.memory_space<vmem>>, vector<16x8xf32>
    %c0_33 = arith.constant 0 : index
    %c40 = arith.constant 40 : index
    %56 = vector.load %arg15[%c0_33, %c40] : memref<16x96xf32, #tpu.memory_space<vmem>>, vector<16x8xf32>
    %c0_34 = arith.constant 0 : index
    %c72 = arith.constant 72 : index
    %57 = vector.load %arg15[%c0_34, %c72] : memref<16x96xf32, #tpu.memory_space<vmem>>, vector<16x8xf32>
    %cst_35 = arith.constant dense<0.000000e+00> : vector<16x16xf32>
    %58 = tpu.matmul %55, %56, %cst_35 {dimension_numbers = #tpu.dot_dimension_numbers<[1], [1], [0], [0], [0, 0, 1, 0], [], []>} : vector<16x8xf32>, vector<16x8xf32>, vector<16x16xf32> -> vector<16x16xf32>
    %cst_36 = arith.constant 0.353553385 : f32
    %59 = vector.broadcast %cst_36 : f32 to vector<16x16xf32>
    %60 = arith.mulf %58, %59 : vector<16x16xf32>
    %61 = arith.addf %60, %31 : vector<16x16xf32>
    %cst_37 = arith.constant dense<0xFF800000> : vector<16xf32>
    %62 = vector.multi_reduction <maximumf>, %61, %cst_37 [1] : vector<16x16xf32> to vector<16xf32>
    %63 = vector.shape_cast %62 : vector<16xf32> to vector<16x1xf32>
    %64 = vector.broadcast %63 : vector<16x1xf32> to vector<16x16xf32>
    %65 = arith.subf %61, %64 : vector<16x16xf32>
    %66 = math.exp %65 : vector<16x16xf32>
    %cst_38 = arith.constant dense<0.000000e+00> : vector<16xf32>
    %67 = vector.multi_reduction <add>, %66, %cst_38 [1] : vector<16x16xf32> to vector<16xf32>
    %68 = vector.shape_cast %67 : vector<16xf32> to vector<16x1xf32>
    %69 = tpu.reciprocal %68 {approx = true} : vector<16x1xf32> -> vector<16x1xf32>
    %70 = vector.broadcast %69 : vector<16x1xf32> to vector<16x16xf32>
    %71 = arith.mulf %66, %70 : vector<16x16xf32>
    %cst_39 = arith.constant dense<0.000000e+00> : vector<16x8xf32>
    %72 = tpu.matmul %71, %57, %cst_39 {dimension_numbers = #tpu.dot_dimension_numbers<[1], [0], [0], [1], [0, 0, 1, 1], [], []>} : vector<16x16xf32>, vector<16x8xf32>, vector<16x8xf32> -> vector<16x8xf32>
    %c8_40 = arith.constant 8 : index
    %c0_41 = arith.constant 0 : index
    %73 = vector.load %arg6[%c8_40, %c0_41] : memref<32x32xf32, #tpu.memory_space<vmem>>, vector<8x32xf32>
    %cst_42 = arith.constant dense<0.000000e+00> : vector<16x32xf32>
    %74 = tpu.matmul %72, %73, %cst_42 {dimension_numbers = #tpu.dot_dimension_numbers<[1], [0], [0], [1], [0, 0, 1, 1], [], []>} : vector<16x8xf32>, vector<8x32xf32>, vector<16x32xf32> -> vector<16x32xf32>
    %75 = arith.addf %54, %74 : vector<16x32xf32>
    %c0_43 = arith.constant 0 : index
    %c16 = arith.constant 16 : index
    %76 = vector.load %arg15[%c0_43, %c16] : memref<16x96xf32, #tpu.memory_space<vmem>>, vector<16x8xf32>
    %c0_44 = arith.constant 0 : index
    %c48 = arith.constant 48 : index
    %77 = vector.load %arg15[%c0_44, %c48] : memref<16x96xf32, #tpu.memory_space<vmem>>, vector<16x8xf32>
    %c0_45 = arith.constant 0 : index
    %c80 = arith.constant 80 : index
    %78 = vector.load %arg15[%c0_45, %c80] : memref<16x96xf32, #tpu.memory_space<vmem>>, vector<16x8xf32>
    %cst_46 = arith.constant dense<0.000000e+00> : vector<16x16xf32>
    %79 = tpu.matmul %76, %77, %cst_46 {dimension_numbers = #tpu.dot_dimension_numbers<[1], [1], [0], [0], [0, 0, 1, 0], [], []>} : vector<16x8xf32>, vector<16x8xf32>, vector<16x16xf32> -> vector<16x16xf32>
    %cst_47 = arith.constant 0.353553385 : f32
    %80 = vector.broadcast %cst_47 : f32 to vector<16x16xf32>
    %81 = arith.mulf %79, %80 : vector<16x16xf32>
    %82 = arith.addf %81, %31 : vector<16x16xf32>
    %cst_48 = arith.constant dense<0xFF800000> : vector<16xf32>
    %83 = vector.multi_reduction <maximumf>, %82, %cst_48 [1] : vector<16x16xf32> to vector<16xf32>
    %84 = vector.shape_cast %83 : vector<16xf32> to vector<16x1xf32>
    %85 = vector.broadcast %84 : vector<16x1xf32> to vector<16x16xf32>
    %86 = arith.subf %82, %85 : vector<16x16xf32>
    %87 = math.exp %86 : vector<16x16xf32>
    %cst_49 = arith.constant dense<0.000000e+00> : vector<16xf32>
    %88 = vector.multi_reduction <add>, %87, %cst_49 [1] : vector<16x16xf32> to vector<16xf32>
    %89 = vector.shape_cast %88 : vector<16xf32> to vector<16x1xf32>
    %90 = tpu.reciprocal %89 {approx = true} : vector<16x1xf32> -> vector<16x1xf32>
    %91 = vector.broadcast %90 : vector<16x1xf32> to vector<16x16xf32>
    %92 = arith.mulf %87, %91 : vector<16x16xf32>
    %cst_50 = arith.constant dense<0.000000e+00> : vector<16x8xf32>
    %93 = tpu.matmul %92, %78, %cst_50 {dimension_numbers = #tpu.dot_dimension_numbers<[1], [0], [0], [1], [0, 0, 1, 1], [], []>} : vector<16x16xf32>, vector<16x8xf32>, vector<16x8xf32> -> vector<16x8xf32>
    %c16_51 = arith.constant 16 : index
    %c0_52 = arith.constant 0 : index
    %94 = vector.load %arg6[%c16_51, %c0_52] : memref<32x32xf32, #tpu.memory_space<vmem>>, vector<8x32xf32>
    %cst_53 = arith.constant dense<0.000000e+00> : vector<16x32xf32>
    %95 = tpu.matmul %93, %94, %cst_53 {dimension_numbers = #tpu.dot_dimension_numbers<[1], [0], [0], [1], [0, 0, 1, 1], [], []>} : vector<16x8xf32>, vector<8x32xf32>, vector<16x32xf32> -> vector<16x32xf32>
    %96 = arith.addf %75, %95 : vector<16x32xf32>
    %c0_54 = arith.constant 0 : index
    %c24 = arith.constant 24 : index
    %97 = vector.load %arg15[%c0_54, %c24] : memref<16x96xf32, #tpu.memory_space<vmem>>, vector<16x8xf32>
    %c0_55 = arith.constant 0 : index
    %c56 = arith.constant 56 : index
    %98 = vector.load %arg15[%c0_55, %c56] : memref<16x96xf32, #tpu.memory_space<vmem>>, vector<16x8xf32>
    %c0_56 = arith.constant 0 : index
    %c88 = arith.constant 88 : index
    %99 = vector.load %arg15[%c0_56, %c88] : memref<16x96xf32, #tpu.memory_space<vmem>>, vector<16x8xf32>
    %cst_57 = arith.constant dense<0.000000e+00> : vector<16x16xf32>
    %100 = tpu.matmul %97, %98, %cst_57 {dimension_numbers = #tpu.dot_dimension_numbers<[1], [1], [0], [0], [0, 0, 1, 0], [], []>} : vector<16x8xf32>, vector<16x8xf32>, vector<16x16xf32> -> vector<16x16xf32>
    %cst_58 = arith.constant 0.353553385 : f32
    %101 = vector.broadcast %cst_58 : f32 to vector<16x16xf32>
    %102 = arith.mulf %100, %101 : vector<16x16xf32>
    %103 = arith.addf %102, %31 : vector<16x16xf32>
    %cst_59 = arith.constant dense<0xFF800000> : vector<16xf32>
    %104 = vector.multi_reduction <maximumf>, %103, %cst_59 [1] : vector<16x16xf32> to vector<16xf32>
    %105 = vector.shape_cast %104 : vector<16xf32> to vector<16x1xf32>
    %106 = vector.broadcast %105 : vector<16x1xf32> to vector<16x16xf32>
    %107 = arith.subf %103, %106 : vector<16x16xf32>
    %108 = math.exp %107 : vector<16x16xf32>
    %cst_60 = arith.constant dense<0.000000e+00> : vector<16xf32>
    %109 = vector.multi_reduction <add>, %108, %cst_60 [1] : vector<16x16xf32> to vector<16xf32>
    %110 = vector.shape_cast %109 : vector<16xf32> to vector<16x1xf32>
    %111 = tpu.reciprocal %110 {approx = true} : vector<16x1xf32> -> vector<16x1xf32>
    %112 = vector.broadcast %111 : vector<16x1xf32> to vector<16x16xf32>
    %113 = arith.mulf %108, %112 : vector<16x16xf32>
    %cst_61 = arith.constant dense<0.000000e+00> : vector<16x8xf32>
    %114 = tpu.matmul %113, %99, %cst_61 {dimension_numbers = #tpu.dot_dimension_numbers<[1], [0], [0], [1], [0, 0, 1, 1], [], []>} : vector<16x16xf32>, vector<16x8xf32>, vector<16x8xf32> -> vector<16x8xf32>
    %c24_62 = arith.constant 24 : index
    %c0_63 = arith.constant 0 : index
    %115 = vector.load %arg6[%c24_62, %c0_63] : memref<32x32xf32, #tpu.memory_space<vmem>>, vector<8x32xf32>
    %cst_64 = arith.constant dense<0.000000e+00> : vector<16x32xf32>
    %116 = tpu.matmul %114, %115, %cst_64 {dimension_numbers = #tpu.dot_dimension_numbers<[1], [0], [0], [1], [0, 0, 1, 1], [], []>} : vector<16x8xf32>, vector<8x32xf32>, vector<16x32xf32> -> vector<16x32xf32>
    %117 = arith.addf %96, %116 : vector<16x32xf32>
    %118 = arith.addf %0, %117 : vector<16x32xf32>
    %c0_65 = arith.constant 0 : index
    %c0_66 = arith.constant 0 : index
    %119 = vector.load %arg8[%c0_65, %c0_66] : memref<1x32xf32, #tpu.memory_space<vmem>>, vector<1x32xf32>
    %c0_67 = arith.constant 0 : index
    %c0_68 = arith.constant 0 : index
    %120 = vector.load %arg9[%c0_67, %c0_68] : memref<1x32xf32, #tpu.memory_space<vmem>>, vector<1x32xf32>
    %cst_69 = arith.constant dense<0.000000e+00> : vector<16xf32>
    %121 = vector.multi_reduction <add>, %118, %cst_69 [1] : vector<16x32xf32> to vector<16xf32>
    %122 = vector.shape_cast %121 : vector<16xf32> to vector<16x1xf32>
    %cst_70 = arith.constant 3.200000e+01 : f32
    %123 = vector.broadcast %cst_70 : f32 to vector<16x1xf32>
    %124 = arith.divf %122, %123 : vector<16x1xf32>
    %125 = vector.broadcast %124 : vector<16x1xf32> to vector<16x32xf32>
    %126 = arith.subf %118, %125 : vector<16x32xf32>
    %127 = arith.mulf %126, %126 : vector<16x32xf32>
    %cst_71 = arith.constant dense<0.000000e+00> : vector<16xf32>
    %128 = vector.multi_reduction <add>, %127, %cst_71 [1] : vector<16x32xf32> to vector<16xf32>
    %129 = vector.shape_cast %128 : vector<16xf32> to vector<16x1xf32>
    %cst_72 = arith.constant 3.200000e+01 : f32
    %130 = vector.broadcast %cst_72 : f32 to vector<16x1xf32>
    %131 = arith.divf %129, %130 : vector<16x1xf32>
    %132 = vector.broadcast %124 : vector<16x1xf32> to vector<16x32xf32>
    %133 = arith.subf %118, %132 : vector<16x32xf32>
    %cst_73 = arith.constant 9.99999974E-6 : f32
    %134 = vector.broadcast %cst_73 : f32 to vector<16x1xf32>
    %135 = arith.addf %131, %134 : vector<16x1xf32>
    %136 = math.rsqrt %135 : vector<16x1xf32>
    %137 = vector.broadcast %136 : vector<16x1xf32> to vector<16x32xf32>
    %138 = arith.mulf %133, %137 : vector<16x32xf32>
    %139 = vector.broadcast %119 : vector<1x32xf32> to vector<16x32xf32>
    %140 = arith.mulf %138, %139 : vector<16x32xf32>
    %141 = vector.broadcast %120 : vector<1x32xf32> to vector<16x32xf32>
    %142 = arith.addf %140, %141 : vector<16x32xf32>
    %c0_74 = arith.constant 0 : index
    %c0_75 = arith.constant 0 : index
    %143 = vector.load %arg10[%c0_74, %c0_75] : memref<32x128xf32, #tpu.memory_space<vmem>>, vector<32x128xf32>
    %cst_76 = arith.constant dense<0.000000e+00> : vector<16x128xf32>
    %144 = tpu.matmul %142, %143, %cst_76 {dimension_numbers = #tpu.dot_dimension_numbers<[1], [0], [0], [1], [0, 0, 1, 1], [], []>} : vector<16x32xf32>, vector<32x128xf32>, vector<16x128xf32> -> vector<16x128xf32>
    %c0_77 = arith.constant 0 : index
    %c0_78 = arith.constant 0 : index
    %145 = vector.load %arg11[%c0_77, %c0_78] : memref<1x128xf32, #tpu.memory_space<vmem>>, vector<1x128xf32>
    %146 = vector.broadcast %145 : vector<1x128xf32> to vector<16x128xf32>
    %147 = arith.addf %144, %146 : vector<16x128xf32>
    %cst_79 = arith.constant 5.000000e-01 : f32
    %148 = vector.broadcast %cst_79 : f32 to vector<16x128xf32>
    %149 = arith.mulf %148, %147 : vector<16x128xf32>
    %cst_80 = arith.constant 4.471500e-02 : f32
    %150 = vector.broadcast %cst_80 : f32 to vector<16x128xf32>
    %151 = arith.mulf %150, %147 : vector<16x128xf32>
    %152 = arith.mulf %151, %147 : vector<16x128xf32>
    %153 = arith.mulf %152, %147 : vector<16x128xf32>
    %154 = arith.addf %147, %153 : vector<16x128xf32>
    %cst_81 = arith.constant 0.797884583 : f32
    %155 = vector.broadcast %cst_81 : f32 to vector<16x128xf32>
    %156 = arith.mulf %155, %154 : vector<16x128xf32>
    %157 = math.tanh %156 : vector<16x128xf32>
    %cst_82 = arith.constant 1.000000e+00 : f32
    %158 = vector.broadcast %cst_82 : f32 to vector<16x128xf32>
    %159 = arith.addf %158, %157 : vector<16x128xf32>
    %160 = arith.mulf %149, %159 : vector<16x128xf32>
    %c0_83 = arith.constant 0 : index
    %c0_84 = arith.constant 0 : index
    %161 = vector.load %arg12[%c0_83, %c0_84] : memref<128x32xf32, #tpu.memory_space<vmem>>, vector<128x32xf32>
    %cst_85 = arith.constant dense<0.000000e+00> : vector<16x32xf32>
    %162 = tpu.matmul %160, %161, %cst_85 {dimension_numbers = #tpu.dot_dimension_numbers<[1], [0], [0], [1], [0, 0, 1, 1], [], []>} : vector<16x128xf32>, vector<128x32xf32>, vector<16x32xf32> -> vector<16x32xf32>
    %c0_86 = arith.constant 0 : index
    %c0_87 = arith.constant 0 : index
    %163 = vector.load %arg13[%c0_86, %c0_87] : memref<1x32xf32, #tpu.memory_space<vmem>>, vector<1x32xf32>
    %164 = vector.broadcast %163 : vector<1x32xf32> to vector<16x32xf32>
    %165 = arith.addf %162, %164 : vector<16x32xf32>
    %166 = arith.addf %118, %165 : vector<16x32xf32>
    %c0_88 = arith.constant 0 : index
    %c0_89 = arith.constant 0 : index
    %167 = vector.load %arg14[%c0_88, %c0_89] : memref<16x32xf32, #tpu.memory_space<vmem>>, vector<16x32xf32>
    tpu.vector_store %arg14[%c0_88, %c0_89], %166 {strides = array<i32>} : memref<16x32xf32, #tpu.memory_space<vmem>>, vector<16x32xf32>,
    return
  }
}

</mosaic_0001>

<llo_original>
// kernel: transformer_model_reg_forward.4
$region0: #{transformer_model_reg_forward.4}
  #allocation0 [shape = 'u32[]', space=smem, size = 0x4, offset = 0x4, fixed_abs, tag = 'smem constant byte address 0x4 - core index']
  #allocation1 [shape = 'u32[144,128]{1,0:T(1,128)}', space=vmem, size = 0x12000, scoped, tag = 'internal scratch']
  %s0 = inlined_call_operand.vmem [shape: f32[16,2], index: 0, kind: input, shape index: {}]
  %s1 = inlined_call_operand.vmem [shape: f32[2,32], index: 1, kind: input, shape index: {}]
  %s2 = inlined_call_operand.vmem [shape: f32[1,32], index: 2, kind: input, shape index: {}]
  %s3 = inlined_call_operand.vmem [shape: f32[16,32], index: 3, kind: input, shape index: {}]
  %s4 = inlined_call_operand.vmem [shape: f32[16,32], index: 4, kind: output, shape index: {}]
  %s5 = sld [smem:[#allocation0]]
  $region26: #{transformer_model_reg_forward.4} parent=0
    _
  %s7 = ssub.s32 1, %s5
  %s8 = scalar_select 0, %s7, %s5
  // Predicated region
  $region2: #{transformer_model_reg_forward.4} parent=0 // pred_check
    _
  $region3: #{transformer_model_reg_forward.4} parent=0 // pred_check_branch
    %10 = sbr.rel (0) target = $region5
  $region4: #{transformer_model_reg_forward.4} parent=0 // pred_region
    _
  $region5: #{transformer_model_reg_forward.4} parent=0 // pred_fallthru
    _
  // Predicated region
  $region6: #{transformer_model_reg_forward.4} parent=0 // pred_check
    _
  $region7: #{transformer_model_reg_forward.4} parent=0 // pred_check_branch
    %12 = sbr.rel (0) target = $region9
  $region8: #{transformer_model_reg_forward.4} parent=0 // pred_region
    _
  $region9: #{transformer_model_reg_forward.4} parent=0 // pred_fallthru
    _
  // Predicated region
  $region10: #{transformer_model_reg_forward.4} parent=0 // pred_check
    _
  $region11: #{transformer_model_reg_forward.4} parent=0 // pred_check_branch
    %14 = sbr.rel (0) target = $region13
  $region12: #{transformer_model_reg_forward.4} parent=0 // pred_region
    _
  $region13: #{transformer_model_reg_forward.4} parent=0 // pred_fallthru
    _
  // Predicated region
  $region14: #{transformer_model_reg_forward.4} parent=0 // pred_check
    _
  $region15: #{transformer_model_reg_forward.4} parent=0 // pred_check_branch
    %16 = sbr.rel (0) target = $region17
  $region16: #{transformer_model_reg_forward.4} parent=0 // pred_region
    _
  $region17: #{transformer_model_reg_forward.4} parent=0 // pred_fallthru
    _
  %v17 = vld [vmem:[%s0] sm:$0xff]
  %v18 = vld [vmem:[%s0 + $0x8] sm:$0xff]
  %v19 = vld [vmem:[%s1] sm:$0x3]
  %v20 = vld [vmem:[%s2] sm:$0x1]
  %v22 = vlaneseq
  %v23 = vshrl.u32 %v22, 7
  %v24 = vsub.s32 0, %v23
  %v25 = vrot.slane %v20, %v24
  %vm27 = vcmask 15360
  %v29 = vsel %vm27, %v17, 0
  %v32 = vsel %vm27, %v18, 0
  %vm34 = vcmask 1041408
  %v36 = vsel %vm34, %v19, 0
  %38 = vmatprep.subr.mxu0 0.0
  %39 = vmatpush1.msra.mxu0 %v36
  %40 = vmatprep.subr.mxu0 0.0
  %41 = vmatpush1.msra.mxu0 0.0
  %42 = vmatprep.subr.mxu0 0.0
  %43 = vmatpush1.msra.mxu0 0.0
  %44 = vmatprep.subr.mxu0 0.0
  %45 = vmatpush1.msra.mxu0 0.0
  %46 = vmatprep.subr.mxu0 0.0
  %47 = vmatpush1.msra.mxu0 0.0
  %48 = vmatprep.subr.mxu0 0.0
  %49 = vmatpush1.msra.mxu0 0.0
  %50 = vmatprep.subr.mxu0 0.0
  %51 = vmatpush1.msra.mxu0 0.0
  %52 = vmatprep.subr.mxu0 0.0
  %53 = vmatpush1.msra.mxu0 0.0
  %54 = vmatprep.subr.mxu0 0.0
  %55 = vmatpush1.msra.mxu0 0.0
  %56 = vmatprep.subr.mxu0 0.0
  %57 = vmatpush1.msra.mxu0 0.0
  %58 = vmatprep.subr.mxu0 0.0
  %59 = vmatpush1.msra.mxu0 0.0
  %60 = vmatprep.subr.mxu0 0.0
  %61 = vmatpush1.msra.mxu0 0.0
  %62 = vmatprep.subr.mxu0 0.0
  %63 = vmatpush1.msra.mxu0 0.0
  %64 = vmatprep.subr.mxu0 0.0
  %65 = vmatpush1.msra.mxu0 0.0
  %66 = vmatprep.subr.mxu0 0.0
  %67 = vmatpush1.msra.mxu0 0.0
  %68 = vmatprep.subr.mxu0 0.0
  %69 = vmatpush1.msra.mxu0 0.0
  %70 = vmatprep.subr.mxu0 0.0
  %71 = vmatpush1.msra.mxu0 0.0
  %72 = vmatprep.subr.mxu0 0.0
  %73 = vmatpush1.msra.mxu0 0.0
  %74 = vmatprep.subr.mxu0 0.0
  %75 = vmatpush1.msra.mxu0 0.0
  %76 = vmatprep.subr.mxu0 0.0
  %77 = vmatpush1.msra.mxu0 0.0
  %78 = vmatprep.subr.mxu0 0.0
  %79 = vmatpush1.msra.mxu0 0.0
  %80 = vmatprep.subr.mxu0 0.0
  %81 = vmatpush1.msra.mxu0 0.0
  %82 = vmatprep.subr.mxu0 0.0
  %83 = vmatpush1.msra.mxu0 0.0
  %84 = vmatprep.subr.mxu0 0.0
  %85 = vmatpush1.msra.mxu0 0.0
  %86 = vmatprep.subr.mxu0 0.0
  %87 = vmatpush1.msra.mxu0 0.0
  %88 = vmatprep.subr.mxu0 0.0
  %89 = vmatpush1.msra.mxu0 0.0
  %90 = vmatprep.subr.mxu0 0.0
  %91 = vmatpush1.msra.mxu0 0.0
  %92 = vmatprep.subr.mxu0 0.0
  %93 = vmatpush1.msra.mxu0 0.0
  %94 = vmatprep.subr.mxu0 0.0
  %95 = vmatpush1.msra.mxu0 0.0
  %96 = vmatprep.subr.mxu0 0.0
  %97 = vmatpush1.msra.mxu0 0.0
  %98 = vmatprep.subr.mxu0 0.0
  %99 = vmatpush1.msra.mxu0 0.0
  %100 = vmatprep.subr.mxu0 0.0
  %101 = vmatpush1.msra.mxu0 0.0
  %102 = vmatprep.mubr.f32.mxu0 0.0
  %103 = vmatmul.mubr.f32.gmra.mrb[0].mxu0 %v29
  %v104 = vpop.f32.mrb[0].mxu0
  %v105 = vadd.f32 %v25, %v104
  %v106 = vpop.f32.mrb[0].mxu0
  %107 = vmatprep.mubr.f32.mxu0 0.0
  %108 = vmatmul.mubr.f32.gmra.mrb[0].mxu0 %v32
  %v109 = vpop.f32.mrb[0].mxu0
  %v110 = vadd.f32 %v25, %v109
  %v111 = vpop.f32.mrb[0].mxu0
  %112 = vdwg.mxu0
  %v113 = vld [vmem:[%s3] sm:$0xff]
  %v114 = vld [vmem:[%s3 + $0x8] sm:$0xff]
  %v115 = vadd.f32 %v105, %v113
  %v116 = vadd.f32 %v110, %v114
  %vm117 = vcmask 261120
  %118 = vst.msk [vmem:[%s4] sm:$0xff] %vm117, %v115
  %119 = vst.msk [vmem:[%s4 + $0x8] sm:$0xff] %vm117, %v116
  // Predicated region
  $region18: #{transformer_model_reg_forward.4} parent=0 // pred_check
    _
  $region19: #{transformer_model_reg_forward.4} parent=0 // pred_check_branch
    %121 = sbr.rel (0) target = $region21
  $region20: #{transformer_model_reg_forward.4} parent=0 // pred_region
    _
  $region21: #{transformer_model_reg_forward.4} parent=0 // pred_fallthru
    _
  // Predicated region
  $region22: #{transformer_model_reg_forward.4} parent=0 // pred_check
    _
  $region23: #{transformer_model_reg_forward.4} parent=0 // pred_check_branch
    %123 = sbr.rel (0) target = $region25
  $region24: #{transformer_model_reg_forward.4} parent=0 // pred_region
    _
  $region25: #{transformer_model_reg_forward.4} parent=0 // pred_fallthru
    _

// kernel: transformer_model_reg_forward.7
$region0: #{transformer_model_reg_forward.7}
  #allocation0 [shape = 'u32[]', space=smem, size = 0x4, offset = 0x4, fixed_abs, tag = 'smem constant byte address 0x4 - core index']
  #allocation1 [shape = 'u32[144,128]{1,0:T(1,128)}', space=vmem, size = 0x12000, scoped, tag = 'internal scratch']
  %s0 = inlined_call_operand.vmem [shape: f32[16,32], index: 0, kind: input, shape index: {}]
  %s1 = inlined_call_operand.vmem [shape: f32[1,32], index: 1, kind: input, shape index: {}]
  %s2 = inlined_call_operand.vmem [shape: f32[1,32], index: 2, kind: input, shape index: {}]
  %s3 = inlined_call_operand.vmem [shape: f32[32,128], index: 3, kind: input, shape index: {}]
  %s4 = inlined_call_operand.vmem [shape: f32[1,128], index: 4, kind: input, shape index: {}]
  %s5 = inlined_call_operand.vmem [shape: f32[16,128], index: 5, kind: output, shape index: {}]
  %s6 = sld [smem:[#allocation0]]
  $region30: #{transformer_model_reg_forward.7} parent=0
    _
  %s8 = ssub.s32 1, %s6
  %s9 = scalar_select 0, %s8, %s6
  // Predicated region
  $region2: #{transformer_model_reg_forward.7} parent=0 // pred_check
    _
  $region3: #{transformer_model_reg_forward.7} parent=0 // pred_check_branch
    %11 = sbr.rel (0) target = $region5
  $region4: #{transformer_model_reg_forward.7} parent=0 // pred_region
    _
  $region5: #{transformer_model_reg_forward.7} parent=0 // pred_fallthru
    _
  // Predicated region
  $region6: #{transformer_model_reg_forward.7} parent=0 // pred_check
    _
  $region7: #{transformer_model_reg_forward.7} parent=0 // pred_check_branch
    %13 = sbr.rel (0) target = $region9
  $region8: #{transformer_model_reg_forward.7} parent=0 // pred_region
    _
  $region9: #{transformer_model_reg_forward.7} parent=0 // pred_fallthru
    _
  // Predicated region
  $region10: #{transformer_model_reg_forward.7} parent=0 // pred_check
    _
  $region11: #{transformer_model_reg_forward.7} parent=0 // pred_check_branch
    %15 = sbr.rel (0) target = $region13
  $region12: #{transformer_model_reg_forward.7} parent=0 // pred_region
    _
  $region13: #{transformer_model_reg_forward.7} parent=0 // pred_fallthru
    _
  // Predicated region
  $region14: #{transformer_model_reg_forward.7} parent=0 // pred_check
    _
  $region15: #{transformer_model_reg_forward.7} parent=0 // pred_check_branch
    %17 = sbr.rel (0) target = $region17
  $region16: #{transformer_model_reg_forward.7} parent=0 // pred_region
    _
  $region17: #{transformer_model_reg_forward.7} parent=0 // pred_fallthru
    _
  // Predicated region
  $region18: #{transformer_model_reg_forward.7} parent=0 // pred_check
    _
  $region19: #{transformer_model_reg_forward.7} parent=0 // pred_check_branch
    %19 = sbr.rel (0) target = $region21
  $region20: #{transformer_model_reg_forward.7} parent=0 // pred_region
    _
  $region21: #{transformer_model_reg_forward.7} parent=0 // pred_fallthru
    _
  %v20 = vld [vmem:[%s0] sm:$0xff]
  %v21 = vld [vmem:[%s0 + $0x8] sm:$0xff]
  %v22 = vld [vmem:[%s1] sm:$0x1]
  %v23 = vld [vmem:[%s2] sm:$0x1]
  %vm24 = vcmask 261120
  %v25 = vsel %vm24, %v20, 0.0
  %26 = vadd.xlane.f32.xlu0 %v25
  %v27 = vpop.xlane.xlu0 %26
  %v28 = vsel %vm24, %v21, 0.0
  %29 = vadd.xlane.f32.xlu0 %v28
  %v30 = vpop.xlane.xlu0 %29
  %v31 = vrcp.pop 32.0
  %v32 = vmul.f32 %v27, %v31
  %v33 = vmul.f32 %v30, %v31
  %v34 = vsub.f32 %v20, %v32
  %v35 = vsub.f32 %v21, %v33
  %v36 = vmul.f32 %v34, %v34
  %v37 = vmul.f32 %v35, %v35
  %v38 = vsel %vm24, %v36, 0.0
  %39 = vadd.xlane.f32.xlu0 %v38
  %v40 = vpop.xlane.xlu0 %39
  %v41 = vsel %vm24, %v37, 0.0
  %42 = vadd.xlane.f32.xlu0 %v41
  %v43 = vpop.xlane.xlu0 %42
  %v44 = vmul.f32 %v40, %v31
  %v45 = vmul.f32 %v43, %v31
  %v46 = vadd.f32 %v44, 1e-05
  %v47 = vadd.f32 %v45, 1e-05
  %v48 = vrsqrt.pop %v46
  %v49 = vrsqrt.pop %v47
  %v50 = vmul.f32 %v34, %v48
  %v51 = vmul.f32 %v35, %v49
  %v53 = vlaneseq
  %v54 = vshrl.u32 %v53, 7
  %v55 = vsub.s32 0, %v54
  %v56 = vrot.slane %v22, %v55
  %v58 = vmul.f32 %v50, %v56
  %v59 = vmul.f32 %v51, %v56
  %v61 = vlaneseq
  %v62 = vshrl.u32 %v61, 7
  %v63 = vsub.s32 0, %v62
  %v64 = vrot.slane %v23, %v63
  %v66 = vadd.f32 %v58, %v64
  %v67 = vadd.f32 %v59, %v64
  %v68 = vld [vmem:[%s3] sm:$0xff]
  %v69 = vld [vmem:[%s3 + $0x8] sm:$0xff]
  %v70 = vld [vmem:[%s3 + $0x10] sm:$0xff]
  %v71 = vld [vmem:[%s3 + $0x18] sm:$0xff]
  %v72 = vld [vmem:[%s4] sm:$0x1]
  %v74 = vlaneseq
  %v75 = vshrl.u32 %v74, 7
  %v76 = vsub.s32 0, %v75
  %v77 = vrot.slane %v72, %v76
  %v80 = vsel %vm24, %v66, 0
  %v83 = vsel %vm24, %v67, 0
  %85 = vmatprep.subr.mxu0 0.0
  %86 = vmatpush1.msra.mxu0 %v68
  %87 = vmatprep.subr.mxu0 0.0
  %88 = vmatpush1.msra.mxu0 %v69
  %89 = vmatprep.subr.mxu0 0.0
  %90 = vmatpush1.msra.mxu0 %v70
  %91 = vmatprep.subr.mxu0 0.0
  %92 = vmatpush1.msra.mxu0 %v71
  %93 = vmatprep.subr.mxu0 0.0
  %94 = vmatpush1.msra.mxu0 0.0
  %95 = vmatprep.subr.mxu0 0.0
  %96 = vmatpush1.msra.mxu0 0.0
  %97 = vmatprep.subr.mxu0 0.0
  %98 = vmatpush1.msra.mxu0 0.0
  %99 = vmatprep.subr.mxu0 0.0
  %100 = vmatpush1.msra.mxu0 0.0
  %101 = vmatprep.subr.mxu0 0.0
  %102 = vmatpush1.msra.mxu0 0.0
  %103 = vmatprep.subr.mxu0 0.0
  %104 = vmatpush1.msra.mxu0 0.0
  %105 = vmatprep.subr.mxu0 0.0
  %106 = vmatpush1.msra.mxu0 0.0
  %107 = vmatprep.subr.mxu0 0.0
  %108 = vmatpush1.msra.mxu0 0.0
  %109 = vmatprep.subr.mxu0 0.0
  %110 = vmatpush1.msra.mxu0 0.0
  %111 = vmatprep.subr.mxu0 0.0
  %112 = vmatpush1.msra.mxu0 0.0
  %113 = vmatprep.subr.mxu0 0.0
  %114 = vmatpush1.msra.mxu0 0.0
  %115 = vmatprep.subr.mxu0 0.0
  %116 = vmatpush1.msra.mxu0 0.0
  %117 = vmatprep.subr.mxu0 0.0
  %118 = vmatpush1.msra.mxu0 0.0
  %119 = vmatprep.subr.mxu0 0.0
  %120 = vmatpush1.msra.mxu0 0.0
  %121 = vmatprep.subr.mxu0 0.0
  %122 = vmatpush1.msra.mxu0 0.0
  %123 = vmatprep.subr.mxu0 0.0
  %124 = vmatpush1.msra.mxu0 0.0
  %125 = vmatprep.subr.mxu0 0.0
  %126 = vmatpush1.msra.mxu0 0.0
  %127 = vmatprep.subr.mxu0 0.0
  %128 = vmatpush1.msra.mxu0 0.0
  %129 = vmatprep.subr.mxu0 0.0
  %130 = vmatpush1.msra.mxu0 0.0
  %131 = vmatprep.subr.mxu0 0.0
  %132 = vmatpush1.msra.mxu0 0.0
  %133 = vmatprep.subr.mxu0 0.0
  %134 = vmatpush1.msra.mxu0 0.0
  %135 = vmatprep.subr.mxu0 0.0
  %136 = vmatpush1.msra.mxu0 0.0
  %137 = vmatprep.subr.mxu0 0.0
  %138 = vmatpush1.msra.mxu0 0.0
  %139 = vmatprep.subr.mxu0 0.0
  %140 = vmatpush1.msra.mxu0 0.0
  %141 = vmatprep.subr.mxu0 0.0
  %142 = vmatpush1.msra.mxu0 0.0
  %143 = vmatprep.subr.mxu0 0.0
  %144 = vmatpush1.msra.mxu0 0.0
  %145 = vmatprep.subr.mxu0 0.0
  %146 = vmatpush1.msra.mxu0 0.0
  %147 = vmatprep.subr.mxu0 0.0
  %148 = vmatpush1.msra.mxu0 0.0
  %149 = vmatprep.mubr.f32.mxu0 0.0
  %150 = vmatmul.mubr.f32.gmra.mrb[0].mxu0 %v80
  %v151 = vpop.f32.mrb[0].mxu0
  %v152 = vadd.f32 %v77, %v151
  %v153 = vpop.f32.mrb[0].mxu0
  %154 = vmatprep.mubr.f32.mxu0 0.0
  %155 = vmatmul.mubr.f32.gmra.mrb[0].mxu0 %v83
  %v156 = vpop.f32.mrb[0].mxu0
  %v157 = vadd.f32 %v77, %v156
  %v158 = vpop.f32.mrb[0].mxu0
  %159 = vdwg.mxu0
  %160 = vst [vmem:[%s5] sm:$0xff] %v152
  %161 = vst [vmem:[%s5 + $0x8] sm:$0xff] %v157
  // Predicated region
  $region22: #{transformer_model_reg_forward.7} parent=0 // pred_check
    _
  $region23: #{transformer_model_reg_forward.7} parent=0 // pred_check_branch
    %163 = sbr.rel (0) target = $region25
  $region24: #{transformer_model_reg_forward.7} parent=0 // pred_region
    _
  $region25: #{transformer_model_reg_forward.7} parent=0 // pred_fallthru
    _
  // Predicated region
  $region26: #{transformer_model_reg_forward.7} parent=0 // pred_check
    _
  $region27: #{transformer_model_reg_forward.7} parent=0 // pred_check_branch
    %165 = sbr.rel (0) target = $region29
  $region28: #{transformer_model_reg_forward.7} parent=0 // pred_region
    _
  $region29: #{transformer_model_reg_forward.7} parent=0 // pred_fallthru
    _

// kernel: transformer_model_reg_forward.5
$region0: #{transformer_model_reg_forward.5}
  #allocation0 [shape = 'u32[]', space=smem, size = 0x4, offset = 0x4, fixed_abs, tag = 'smem constant byte address 0x4 - core index']
  #allocation1 [shape = 'u32[144,128]{1,0:T(1,128)}', space=vmem, size = 0x12000, scoped, tag = 'internal scratch']
  #allocation2 [shape = 'f32[16,96]{1,0:T(8,128)}', space=vmem, size = 0x2000, scoped, tag = 'scratch operand']
  %s0 = inlined_call_operand.vmem [shape: f32[16,32], index: 0, kind: input, shape index: {}]
  %s1 = inlined_call_operand.vmem [shape: f32[16,16], index: 1, kind: input, shape index: {}]
  %s2 = inlined_call_operand.vmem [shape: f32[1,32], index: 2, kind: input, shape index: {}]
  %s3 = inlined_call_operand.vmem [shape: f32[1,32], index: 3, kind: input, shape index: {}]
  %s4 = inlined_call_operand.vmem [shape: f32[32,96], index: 4, kind: input, shape index: {}]
  %s5 = inlined_call_operand.vmem [shape: f32[1,96], index: 5, kind: input, shape index: {}]
  %s6 = inlined_call_operand.vmem [shape: f32[32,32], index: 6, kind: input, shape index: {}]
  %s7 = inlined_call_operand.vmem [shape: f32[1,32], index: 7, kind: input, shape index: {}]
  %s8 = inlined_call_operand.vmem [shape: f32[1,32], index: 8, kind: input, shape index: {}]
  %s9 = inlined_call_operand.vmem [shape: f32[1,32], index: 9, kind: input, shape index: {}]
  %s10 = inlined_call_operand.vmem [shape: f32[32,128], index: 10, kind: input, shape index: {}]
  %s11 = inlined_call_operand.vmem [shape: f32[1,128], index: 11, kind: input, shape index: {}]
  %s12 = inlined_call_operand.vmem [shape: f32[128,32], index: 12, kind: input, shape index: {}]
  %s13 = inlined_call_operand.vmem [shape: f32[1,32], index: 13, kind: input, shape index: {}]
  %s14 = inlined_call_operand.vmem [shape: f32[16,32], index: 14, kind: output, shape index: {}]
  %s15 = sld [smem:[#allocation0]]
  $region66: #{transformer_model_reg_forward.5} parent=0
    _
  %s17 = ssub.s32 1, %s15
  %s18 = scalar_select 0, %s17, %s15
  // Predicated region
  $region2: #{transformer_model_reg_forward.5} parent=0 // pred_check
    _
  $region3: #{transformer_model_reg_forward.5} parent=0 // pred_check_branch
    %20 = sbr.rel (0) target = $region5
  $region4: #{transformer_model_reg_forward.5} parent=0 // pred_region
    _
  $region5: #{transformer_model_reg_forward.5} parent=0 // pred_fallthru
    _
  // Predicated region
  $region6: #{transformer_model_reg_forward.5} parent=0 // pred_check
    _
  $region7: #{transformer_model_reg_forward.5} parent=0 // pred_check_branch
    %22 = sbr.rel (0) target = $region9
  $region8: #{transformer_model_reg_forward.5} parent=0 // pred_region
    _
  $region9: #{transformer_model_reg_forward.5} parent=0 // pred_fallthru
    _
  // Predicated region
  $region10: #{transformer_model_reg_forward.5} parent=0 // pred_check
    _
  $region11: #{transformer_model_reg_forward.5} parent=0 // pred_check_branch
    %24 = sbr.rel (0) target = $region13
  $region12: #{transformer_model_reg_forward.5} parent=0 // pred_region
    _
  $region13: #{transformer_model_reg_forward.5} parent=0 // pred_fallthru
    _
  // Predicated region
  $region14: #{transformer_model_reg_forward.5} parent=0 // pred_check
    _
  $region15: #{transformer_model_reg_forward.5} parent=0 // pred_check_branch
    %26 = sbr.rel (0) target = $region17
  $region16: #{transformer_model_reg_forward.5} parent=0 // pred_region
    _
  $region17: #{transformer_model_reg_forward.5} parent=0 // pred_fallthru
    _
  // Predicated region
  $region18: #{transformer_model_reg_forward.5} parent=0 // pred_check
    _
  $region19: #{transformer_model_reg_forward.5} parent=0 // pred_check_branch
    %28 = sbr.rel (0) target = $region21
  $region20: #{transformer_model_reg_forward.5} parent=0 // pred_region
    _
  $region21: #{transformer_model_reg_forward.5} parent=0 // pred_fallthru
    _
  // Predicated region
  $region22: #{transformer_model_reg_forward.5} parent=0 // pred_check
    _
  $region23: #{transformer_model_reg_forward.5} parent=0 // pred_check_branch
    %30 = sbr.rel (0) target = $region25
  $region24: #{transformer_model_reg_forward.5} parent=0 // pred_region
    _
  $region25: #{transformer_model_reg_forward.5} parent=0 // pred_fallthru
    _
  // Predicated region
  $region26: #{transformer_model_reg_forward.5} parent=0 // pred_check
    _
  $region27: #{transformer_model_reg_forward.5} parent=0 // pred_check_branch
    %32 = sbr.rel (0) target = $region29
  $region28: #{transformer_model_reg_forward.5} parent=0 // pred_region
    _
  $region29: #{transformer_model_reg_forward.5} parent=0 // pred_fallthru
    _
  // Predicated region
  $region30: #{transformer_model_reg_forward.5} parent=0 // pred_check
    _
  $region31: #{transformer_model_reg_forward.5} parent=0 // pred_check_branch
    %34 = sbr.rel (0) target = $region33
  $region32: #{transformer_model_reg_forward.5} parent=0 // pred_region
    _
  $region33: #{transformer_model_reg_forward.5} parent=0 // pred_fallthru
    _
  // Predicated region
  $region34: #{transformer_model_reg_forward.5} parent=0 // pred_check
    _
  $region35: #{transformer_model_reg_forward.5} parent=0 // pred_check_branch
    %36 = sbr.rel (0) target = $region37
  $region36: #{transformer_model_reg_forward.5} parent=0 // pred_region
    _
  $region37: #{transformer_model_reg_forward.5} parent=0 // pred_fallthru
    _
  // Predicated region
  $region38: #{transformer_model_reg_forward.5} parent=0 // pred_check
    _
  $region39: #{transformer_model_reg_forward.5} parent=0 // pred_check_branch
    %38 = sbr.rel (0) target = $region41
  $region40: #{transformer_model_reg_forward.5} parent=0 // pred_region
    _
  $region41: #{transformer_model_reg_forward.5} parent=0 // pred_fallthru
    _
  // Predicated region
  $region42: #{transformer_model_reg_forward.5} parent=0 // pred_check
    _
  $region43: #{transformer_model_reg_forward.5} parent=0 // pred_check_branch
    %40 = sbr.rel (0) target = $region45
  $region44: #{transformer_model_reg_forward.5} parent=0 // pred_region
    _
  $region45: #{transformer_model_reg_forward.5} parent=0 // pred_fallthru
    _
  // Predicated region
  $region46: #{transformer_model_reg_forward.5} parent=0 // pred_check
    _
  $region47: #{transformer_model_reg_forward.5} parent=0 // pred_check_branch
    %42 = sbr.rel (0) target = $region49
  $region48: #{transformer_model_reg_forward.5} parent=0 // pred_region
    _
  $region49: #{transformer_model_reg_forward.5} parent=0 // pred_fallthru
    _
  // Predicated region
  $region50: #{transformer_model_reg_forward.5} parent=0 // pred_check
    _
  $region51: #{transformer_model_reg_forward.5} parent=0 // pred_check_branch
    %44 = sbr.rel (0) target = $region53
  $region52: #{transformer_model_reg_forward.5} parent=0 // pred_region
    _
  $region53: #{transformer_model_reg_forward.5} parent=0 // pred_fallthru
    _
  // Predicated region
  $region54: #{transformer_model_reg_forward.5} parent=0 // pred_check
    _
  $region55: #{transformer_model_reg_forward.5} parent=0 // pred_check_branch
    %46 = sbr.rel (0) target = $region57
  $region56: #{transformer_model_reg_forward.5} parent=0 // pred_region
    _
  $region57: #{transformer_model_reg_forward.5} parent=0 // pred_fallthru
    _
  %v47 = vld [vmem:[%s0] sm:$0xff]
  %v48 = vld [vmem:[%s0 + $0x8] sm:$0xff]
  %v49 = vld [vmem:[%s2] sm:$0x1]
  %v50 = vld [vmem:[%s3] sm:$0x1]
  %vm51 = vcmask 261120
  %v52 = vsel %vm51, %v47, 0.0
  %53 = vadd.xlane.f32.xlu0 %v52
  %v54 = vpop.xlane.xlu0 %53
  %v55 = vsel %vm51, %v48, 0.0
  %56 = vadd.xlane.f32.xlu0 %v55
  %v57 = vpop.xlane.xlu0 %56
  %v58 = vrcp.pop 32.0
  %v59 = vmul.f32 %v54, %v58
  %v60 = vmul.f32 %v57, %v58
  %v61 = vsub.f32 %v47, %v59
  %v62 = vsub.f32 %v48, %v60
  %v63 = vmul.f32 %v61, %v61
  %v64 = vmul.f32 %v62, %v62
  %v65 = vsel %vm51, %v63, 0.0
  %66 = vadd.xlane.f32.xlu0 %v65
  %v67 = vpop.xlane.xlu0 %66
  %v68 = vsel %vm51, %v64, 0.0
  %69 = vadd.xlane.f32.xlu0 %v68
  %v70 = vpop.xlane.xlu0 %69
  %v71 = vmul.f32 %v67, %v58
  %v72 = vmul.f32 %v70, %v58
  %v73 = vadd.f32 %v71, 1e-05
  %v74 = vadd.f32 %v72, 1e-05
  %v75 = vrsqrt.pop %v73
  %v76 = vrsqrt.pop %v74
  %v77 = vmul.f32 %v61, %v75
  %v78 = vmul.f32 %v62, %v76
  %v80 = vlaneseq
  %v81 = vshrl.u32 %v80, 7
  %v82 = vsub.s32 0, %v81
  %v83 = vrot.slane %v49, %v82
  %v85 = vmul.f32 %v77, %v83
  %v86 = vmul.f32 %v78, %v83
  %v88 = vlaneseq
  %v89 = vshrl.u32 %v88, 7
  %v90 = vsub.s32 0, %v89
  %v91 = vrot.slane %v50, %v90
  %v93 = vadd.f32 %v85, %v91
  %v94 = vadd.f32 %v86, %v91
  %v95 = vld [vmem:[%s4] sm:$0xff]
  %v96 = vld [vmem:[%s4 + $0x8] sm:$0xff]
  %v97 = vld [vmem:[%s4 + $0x10] sm:$0xff]
  %v98 = vld [vmem:[%s4 + $0x18] sm:$0xff]
  %v99 = vld [vmem:[%s5] sm:$0x1]
  %v101 = vlaneseq
  %v102 = vshrl.u32 %v101, 7
  %v103 = vsub.s32 0, %v102
  %v104 = vrot.slane %v99, %v103
  %v107 = vsel %vm51, %v93, 0
  %v110 = vsel %vm51, %v94, 0
  %112 = vmatprep.subr.mxu0 0.0
  %113 = vmatpush1.msra.mxu0 %v95
  %114 = vmatprep.subr.mxu0 0.0
  %115 = vmatpush1.msra.mxu0 %v96
  %116 = vmatprep.subr.mxu0 0.0
  %117 = vmatpush1.msra.mxu0 %v97
  %118 = vmatprep.subr.mxu0 0.0
  %119 = vmatpush1.msra.mxu0 %v98
  %120 = vmatprep.subr.mxu0 0.0
  %121 = vmatpush1.msra.mxu0 0.0
  %122 = vmatprep.subr.mxu0 0.0
  %123 = vmatpush1.msra.mxu0 0.0
  %124 = vmatprep.subr.mxu0 0.0
  %125 = vmatpush1.msra.mxu0 0.0
  %126 = vmatprep.subr.mxu0 0.0
  %127 = vmatpush1.msra.mxu0 0.0
  %128 = vmatprep.subr.mxu0 0.0
  %129 = vmatpush1.msra.mxu0 0.0
  %130 = vmatprep.subr.mxu0 0.0
  %131 = vmatpush1.msra.mxu0 0.0
  %132 = vmatprep.subr.mxu0 0.0
  %133 = vmatpush1.msra.mxu0 0.0
  %134 = vmatprep.subr.mxu0 0.0
  %135 = vmatpush1.msra.mxu0 0.0
  %136 = vmatprep.subr.mxu0 0.0
  %137 = vmatpush1.msra.mxu0 0.0
  %138 = vmatprep.subr.mxu0 0.0
  %139 = vmatpush1.msra.mxu0 0.0
  %140 = vmatprep.subr.mxu0 0.0
  %141 = vmatpush1.msra.mxu0 0.0
  %142 = vmatprep.subr.mxu0 0.0
  %143 = vmatpush1.msra.mxu0 0.0
  %144 = vmatprep.subr.mxu0 0.0
  %145 = vmatpush1.msra.mxu0 0.0
  %146 = vmatprep.subr.mxu0 0.0
  %147 = vmatpush1.msra.mxu0 0.0
  %148 = vmatprep.subr.mxu0 0.0
  %149 = vmatpush1.msra.mxu0 0.0
  %150 = vmatprep.subr.mxu0 0.0
  %151 = vmatpush1.msra.mxu0 0.0
  %152 = vmatprep.subr.mxu0 0.0
  %153 = vmatpush1.msra.mxu0 0.0
  %154 = vmatprep.subr.mxu0 0.0
  %155 = vmatpush1.msra.mxu0 0.0
  %156 = vmatprep.subr.mxu0 0.0
  %157 = vmatpush1.msra.mxu0 0.0
  %158 = vmatprep.subr.mxu0 0.0
  %159 = vmatpush1.msra.mxu0 0.0
  %160 = vmatprep.subr.mxu0 0.0
  %161 = vmatpush1.msra.mxu0 0.0
  %162 = vmatprep.subr.mxu0 0.0
  %163 = vmatpush1.msra.mxu0 0.0
  %164 = vmatprep.subr.mxu0 0.0
  %165 = vmatpush1.msra.mxu0 0.0
  %166 = vmatprep.subr.mxu0 0.0
  %167 = vmatpush1.msra.mxu0 0.0
  %168 = vmatprep.subr.mxu0 0.0
  %169 = vmatpush1.msra.mxu0 0.0
  %170 = vmatprep.subr.mxu0 0.0
  %171 = vmatpush1.msra.mxu0 0.0
  %172 = vmatprep.subr.mxu0 0.0
  %173 = vmatpush1.msra.mxu0 0.0
  %174 = vmatprep.subr.mxu0 0.0
  %175 = vmatpush1.msra.mxu0 0.0
  %176 = vmatprep.mubr.f32.mxu0 0.0
  %177 = vmatmul.mubr.f32.gmra.mrb[0].mxu0 %v107
  %v178 = vpop.f32.mrb[0].mxu0
  %v179 = vadd.f32 %v104, %v178
  %v180 = vpop.f32.mrb[0].mxu0
  %181 = vmatprep.mubr.f32.mxu0 0.0
  %182 = vmatmul.mubr.f32.gmra.mrb[0].mxu0 %v110
  %v183 = vpop.f32.mrb[0].mxu0
  %v184 = vadd.f32 %v104, %v183
  %v185 = vpop.f32.mrb[0].mxu0
  %186 = vdwg.mxu0
  %vm187 = vcmask 785408
  %188 = vst.msk [vmem:[#allocation2] sm:$0xff] %vm187, %v179
  %189 = vst.msk [vmem:[#allocation2 + $0x8] sm:$0xff] %vm187, %v184
  %v190 = vld [vmem:[%s1] sm:$0xff]
  %v191 = vld [vmem:[%s1 + $0x8] sm:$0xff]
  %v192 = vld [vmem:[%s7] sm:$0x1]
  %v193 = vld [vmem:[#allocation2] sm:$0xff]
  %v194 = vld [vmem:[#allocation2 + $0x8] sm:$0xff]
  %197 = vrot.lane.b32.xlu0 %v193, 96
  %v198 = vpop.permute.xlu0 %197
  %199 = vrot.lane.b32.xlu0 %v194, 96
  %v200 = vpop.permute.xlu0 %199
  %vm201 = vcmask 64512
  %v202 = vsel %vm201, %v193, 0
  %v204 = vsel %vm201, %v194, 0
  %v206 = vsel %vm201, %v198, 0
  %v208 = vsel %vm201, %v200, 0
  %210 = vmatprep.subr.mxu0 0.0
  %211 = vmatpush1.xpose.msra.mxu0 %v206
  %212 = vmatprep.subr.mxu0 0.0
  %213 = vmatpush1.xpose.msra.mxu0 %v208
  %214 = vmatprep.subr.mxu0 0.0
  %215 = vmatpush1.xpose.msra.mxu0 0.0
  %216 = vmatprep.subr.mxu0 0.0
  %217 = vmatpush1.xpose.msra.mxu0 0.0
  %218 = vmatprep.subr.mxu0 0.0
  %219 = vmatpush1.xpose.msra.mxu0 0.0
  %220 = vmatprep.subr.mxu0 0.0
  %221 = vmatpush1.xpose.msra.mxu0 0.0
  %222 = vmatprep.subr.mxu0 0.0
  %223 = vmatpush1.xpose.msra.mxu0 0.0
  %224 = vmatprep.subr.mxu0 0.0
  %225 = vmatpush1.xpose.msra.mxu0 0.0
  %226 = vmatprep.subr.mxu0 0.0
  %227 = vmatpush1.xpose.msra.mxu0 0.0
  %228 = vmatprep.subr.mxu0 0.0
  %229 = vmatpush1.xpose.msra.mxu0 0.0
  %230 = vmatprep.subr.mxu0 0.0
  %231 = vmatpush1.xpose.msra.mxu0 0.0
  %232 = vmatprep.subr.mxu0 0.0
  %233 = vmatpush1.xpose.msra.mxu0 0.0
  %234 = vmatprep.subr.mxu0 0.0
  %235 = vmatpush1.xpose.msra.mxu0 0.0
  %236 = vmatprep.subr.mxu0 0.0
  %237 = vmatpush1.xpose.msra.mxu0 0.0
  %238 = vmatprep.subr.mxu0 0.0
  %239 = vmatpush1.xpose.msra.mxu0 0.0
  %240 = vmatprep.subr.mxu0 0.0
  %241 = vmatpush1.xpose.msra.mxu0 0.0
  %242 = vmatprep.subr.mxu0 0.0
  %243 = vmatpush1.xpose.msra.mxu0 0.0
  %244 = vmatprep.subr.mxu0 0.0
  %245 = vmatpush1.xpose.msra.mxu0 0.0
  %246 = vmatprep.subr.mxu0 0.0
  %247 = vmatpush1.xpose.msra.mxu0 0.0
  %248 = vmatprep.subr.mxu0 0.0
  %249 = vmatpush1.xpose.msra.mxu0 0.0
  %250 = vmatprep.subr.mxu0 0.0
  %251 = vmatpush1.xpose.msra.mxu0 0.0
  %252 = vmatprep.subr.mxu0 0.0
  %253 = vmatpush1.xpose.msra.mxu0 0.0
  %254 = vmatprep.subr.mxu0 0.0
  %255 = vmatpush1.xpose.msra.mxu0 0.0
  %256 = vmatprep.subr.mxu0 0.0
  %257 = vmatpush1.xpose.msra.mxu0 0.0
  %258 = vmatprep.subr.mxu0 0.0
  %259 = vmatpush1.xpose.msra.mxu0 0.0
  %260 = vmatprep.subr.mxu0 0.0
  %261 = vmatpush1.xpose.msra.mxu0 0.0
  %262 = vmatprep.subr.mxu0 0.0
  %263 = vmatpush1.xpose.msra.mxu0 0.0
  %264 = vmatprep.subr.mxu0 0.0
  %265 = vmatpush1.xpose.msra.mxu0 0.0
  %266 = vmatprep.subr.mxu0 0.0
  %267 = vmatpush1.xpose.msra.mxu0 0.0
  %268 = vmatprep.subr.mxu0 0.0
  %269 = vmatpush1.xpose.msra.mxu0 0.0
  %270 = vmatprep.subr.mxu0 0.0
  %271 = vmatpush1.xpose.msra.mxu0 0.0
  %272 = vmatprep.subr.mxu0 0.0
  %273 = vmatpush1.xpose.msra.mxu0 0.0
  %274 = vmatprep.mubr.f32.mxu0 0.0
  %275 = vmatmul.mubr.f32.gmra.mrb[0].mxu0 %v202
  %v276 = vpop.f32.mrb[0].mxu0
  %v277 = vadd.f32 0.0, %v276
  %v278 = vpop.f32.mrb[0].mxu0
  %279 = vmatprep.mubr.f32.mxu0 0.0
  %280 = vmatmul.mubr.f32.gmra.mrb[0].mxu0 %v204
  %v281 = vpop.f32.mrb[0].mxu0
  %v282 = vadd.f32 0.0, %v281
  %v283 = vpop.f32.mrb[0].mxu0
  %284 = vdwg.mxu0
  %v285 = vmul.f32 %v277, 0.35355338
  %v286 = vmul.f32 %v282, 0.35355338
  %v287 = vadd.f32 %v285, %v190
  %v288 = vadd.f32 %v286, %v191
  %vm289 = vcmask 130048
  %v290 = vsel %vm289, %v287, -inf
  %291 = vmax.xlane.f32.xlu0 %v290
  %v292 = vpop.xlane.xlu0 %291
  %v293 = vsel %vm289, %v288, -inf
  %294 = vmax.xlane.f32.xlu0 %v293
  %v295 = vpop.xlane.xlu0 %294
  %v296 = vsub.f32 %v287, %v292
  %v297 = vsub.f32 %v288, %v295
  %v298 = vmul.f32 %v296, 1.442695
  %v299 = vpow.pop %v298
  %v300 = vmul.f32 %v297, 1.442695
  %v301 = vpow.pop %v300
  %v302 = vsel %vm289, %v299, 0.0
  %303 = vadd.xlane.f32.xlu0 %v302
  %v304 = vpop.xlane.xlu0 %303
  %v305 = vsel %vm289, %v301, 0.0
  %306 = vadd.xlane.f32.xlu0 %v305
  %v307 = vpop.xlane.xlu0 %306
  %v308 = vrcp.pop %v304
  %v309 = vrcp.pop %v307
  %v310 = vmul.f32 %v299, %v308
  %v311 = vmul.f32 %v301, %v309
  %312 = vrot.lane.b32.xlu0 %v193, 64
  %v313 = vpop.permute.xlu0 %312
  %314 = vrot.lane.b32.xlu0 %v194, 64
  %v315 = vpop.permute.xlu0 %314
  %v319 = vsel %vm289, %v310, 0
  %v322 = vsel %vm289, %v311, 0
  %324 = vmatprep.subr.mxu0 0.0
  %325 = vmatpush1.msra.mxu0 %v313
  %326 = vmatprep.subr.mxu0 0.0
  %327 = vmatpush1.msra.mxu0 %v315
  %328 = vmatprep.subr.mxu0 0.0
  %329 = vmatpush1.msra.mxu0 0.0
  %330 = vmatprep.subr.mxu0 0.0
  %331 = vmatpush1.msra.mxu0 0.0
  %332 = vmatprep.subr.mxu0 0.0
  %333 = vmatpush1.msra.mxu0 0.0
  %334 = vmatprep.subr.mxu0 0.0
  %335 = vmatpush1.msra.mxu0 0.0
  %336 = vmatprep.subr.mxu0 0.0
  %337 = vmatpush1.msra.mxu0 0.0
  %338 = vmatprep.subr.mxu0 0.0
  %339 = vmatpush1.msra.mxu0 0.0
  %340 = vmatprep.subr.mxu0 0.0
  %341 = vmatpush1.msra.mxu0 0.0
  %342 = vmatprep.subr.mxu0 0.0
  %343 = vmatpush1.msra.mxu0 0.0
  %344 = vmatprep.subr.mxu0 0.0
  %345 = vmatpush1.msra.mxu0 0.0
  %346 = vmatprep.subr.mxu0 0.0
  %347 = vmatpush1.msra.mxu0 0.0
  %348 = vmatprep.subr.mxu0 0.0
  %349 = vmatpush1.msra.mxu0 0.0
  %350 = vmatprep.subr.mxu0 0.0
  %351 = vmatpush1.msra.mxu0 0.0
  %352 = vmatprep.subr.mxu0 0.0
  %353 = vmatpush1.msra.mxu0 0.0
  %354 = vmatprep.subr.mxu0 0.0
  %355 = vmatpush1.msra.mxu0 0.0
  %356 = vmatprep.subr.mxu0 0.0
  %357 = vmatpush1.msra.mxu0 0.0
  %358 = vmatprep.subr.mxu0 0.0
  %359 = vmatpush1.msra.mxu0 0.0
  %360 = vmatprep.subr.mxu0 0.0
  %361 = vmatpush1.msra.mxu0 0.0
  %362 = vmatprep.subr.mxu0 0.0
  %363 = vmatpush1.msra.mxu0 0.0
  %364 = vmatprep.subr.mxu0 0.0
  %365 = vmatpush1.msra.mxu0 0.0
  %366 = vmatprep.subr.mxu0 0.0
  %367 = vmatpush1.msra.mxu0 0.0
  %368 = vmatprep.subr.mxu0 0.0
  %369 = vmatpush1.msra.mxu0 0.0
  %370 = vmatprep.subr.mxu0 0.0
  %371 = vmatpush1.msra.mxu0 0.0
  %372 = vmatprep.subr.mxu0 0.0
  %373 = vmatpush1.msra.mxu0 0.0
  %374 = vmatprep.subr.mxu0 0.0
  %375 = vmatpush1.msra.mxu0 0.0
  %376 = vmatprep.subr.mxu0 0.0
  %377 = vmatpush1.msra.mxu0 0.0
  %378 = vmatprep.subr.mxu0 0.0
  %379 = vmatpush1.msra.mxu0 0.0
  %380 = vmatprep.subr.mxu0 0.0
  %381 = vmatpush1.msra.mxu0 0.0
  %382 = vmatprep.subr.mxu0 0.0
  %383 = vmatpush1.msra.mxu0 0.0
  %384 = vmatprep.subr.mxu0 0.0
  %385 = vmatpush1.msra.mxu0 0.0
  %386 = vmatprep.subr.mxu0 0.0
  %387 = vmatpush1.msra.mxu0 0.0
  %388 = vmatprep.mubr.f32.mxu0 0.0
  %389 = vmatmul.mubr.f32.gmra.mrb[0].mxu0 %v319
  %v390 = vpop.f32.mrb[0].mxu0
  %v391 = vadd.f32 0.0, %v390
  %v392 = vpop.f32.mrb[0].mxu0
  %393 = vmatprep.mubr.f32.mxu0 0.0
  %394 = vmatmul.mubr.f32.gmra.mrb[0].mxu0 %v322
  %v395 = vpop.f32.mrb[0].mxu0
  %v396 = vadd.f32 0.0, %v395
  %v397 = vpop.f32.mrb[0].mxu0
  %398 = vdwg.mxu0
  %v399 = vld [vmem:[%s6] sm:$0xff]
  %v401 = vsel %vm201, %v391, 0
  %v404 = vsel %vm201, %v396, 0
  %406 = vmatprep.subr.mxu0 0.0
  %407 = vmatpush1.msra.mxu0 %v399
  %408 = vmatprep.subr.mxu0 0.0
  %409 = vmatpush1.msra.mxu0 0.0
  %410 = vmatprep.subr.mxu0 0.0
  %411 = vmatpush1.msra.mxu0 0.0
  %412 = vmatprep.subr.mxu0 0.0
  %413 = vmatpush1.msra.mxu0 0.0
  %414 = vmatprep.subr.mxu0 0.0
  %415 = vmatpush1.msra.mxu0 0.0
  %416 = vmatprep.subr.mxu0 0.0
  %417 = vmatpush1.msra.mxu0 0.0
  %418 = vmatprep.subr.mxu0 0.0
  %419 = vmatpush1.msra.mxu0 0.0
  %420 = vmatprep.subr.mxu0 0.0
  %421 = vmatpush1.msra.mxu0 0.0
  %422 = vmatprep.subr.mxu0 0.0
  %423 = vmatpush1.msra.mxu0 0.0
  %424 = vmatprep.subr.mxu0 0.0
  %425 = vmatpush1.msra.mxu0 0.0
  %426 = vmatprep.subr.mxu0 0.0
  %427 = vmatpush1.msra.mxu0 0.0
  %428 = vmatprep.subr.mxu0 0.0
  %429 = vmatpush1.msra.mxu0 0.0
  %430 = vmatprep.subr.mxu0 0.0
  %431 = vmatpush1.msra.mxu0 0.0
  %432 = vmatprep.subr.mxu0 0.0
  %433 = vmatpush1.msra.mxu0 0.0
  %434 = vmatprep.subr.mxu0 0.0
  %435 = vmatpush1.msra.mxu0 0.0
  %436 = vmatprep.subr.mxu0 0.0
  %437 = vmatpush1.msra.mxu0 0.0
  %438 = vmatprep.subr.mxu0 0.0
  %439 = vmatpush1.msra.mxu0 0.0
  %440 = vmatprep.subr.mxu0 0.0
  %441 = vmatpush1.msra.mxu0 0.0
  %442 = vmatprep.subr.mxu0 0.0
  %443 = vmatpush1.msra.mxu0 0.0
  %444 = vmatprep.subr.mxu0 0.0
  %445 = vmatpush1.msra.mxu0 0.0
  %446 = vmatprep.subr.mxu0 0.0
  %447 = vmatpush1.msra.mxu0 0.0
  %448 = vmatprep.subr.mxu0 0.0
  %449 = vmatpush1.msra.mxu0 0.0
  %450 = vmatprep.subr.mxu0 0.0
  %451 = vmatpush1.msra.mxu0 0.0
  %452 = vmatprep.subr.mxu0 0.0
  %453 = vmatpush1.msra.mxu0 0.0
  %454 = vmatprep.subr.mxu0 0.0
  %455 = vmatpush1.msra.mxu0 0.0
  %456 = vmatprep.subr.mxu0 0.0
  %457 = vmatpush1.msra.mxu0 0.0
  %458 = vmatprep.subr.mxu0 0.0
  %459 = vmatpush1.msra.mxu0 0.0
  %460 = vmatprep.subr.mxu0 0.0
  %461 = vmatpush1.msra.mxu0 0.0
  %462 = vmatprep.subr.mxu0 0.0
  %463 = vmatpush1.msra.mxu0 0.0
  %464 = vmatprep.subr.mxu0 0.0
  %465 = vmatpush1.msra.mxu0 0.0
  %466 = vmatprep.subr.mxu0 0.0
  %467 = vmatpush1.msra.mxu0 0.0
  %468 = vmatprep.subr.mxu0 0.0
  %469 = vmatpush1.msra.mxu0 0.0
  %470 = vmatprep.mubr.f32.mxu0 0.0
  %471 = vmatmul.mubr.f32.gmra.mrb[0].mxu0 %v401
  %v472 = vpop.f32.mrb[0].mxu0
  %v473 = vadd.f32 0.0, %v472
  %v474 = vpop.f32.mrb[0].mxu0
  %475 = vmatprep.mubr.f32.mxu0 0.0
  %476 = vmatmul.mubr.f32.gmra.mrb[0].mxu0 %v404
  %v477 = vpop.f32.mrb[0].mxu0
  %v478 = vadd.f32 0.0, %v477
  %v479 = vpop.f32.mrb[0].mxu0
  %480 = vdwg.mxu0
  %v482 = vlaneseq
  %v483 = vshrl.u32 %v482, 7
  %v484 = vsub.s32 0, %v483
  %v485 = vrot.slane %v192, %v484
  %v487 = vadd.f32 %v485, %v473
  %v488 = vadd.f32 %v485, %v478
  %489 = vrot.lane.b32.xlu0 %v193, 120
  %v490 = vpop.permute.xlu0 %489
  %491 = vrot.lane.b32.xlu0 %v194, 120
  %v492 = vpop.permute.xlu0 %491
  %493 = vrot.lane.b32.xlu0 %v193, 88
  %v494 = vpop.permute.xlu0 %493
  %495 = vrot.lane.b32.xlu0 %v194, 88
  %v496 = vpop.permute.xlu0 %495
  %v497 = vsel %vm201, %v490, 0
  %v499 = vsel %vm201, %v492, 0
  %v501 = vsel %vm201, %v494, 0
  %v503 = vsel %vm201, %v496, 0
  %505 = vmatprep.subr.mxu0 0.0
  %506 = vmatpush1.xpose.msra.mxu0 %v501
  %507 = vmatprep.subr.mxu0 0.0
  %508 = vmatpush1.xpose.msra.mxu0 %v503
  %509 = vmatprep.subr.mxu0 0.0
  %510 = vmatpush1.xpose.msra.mxu0 0.0
  %511 = vmatprep.subr.mxu0 0.0
  %512 = vmatpush1.xpose.msra.mxu0 0.0
  %513 = vmatprep.subr.mxu0 0.0
  %514 = vmatpush1.xpose.msra.mxu0 0.0
  %515 = vmatprep.subr.mxu0 0.0
  %516 = vmatpush1.xpose.msra.mxu0 0.0
  %517 = vmatprep.subr.mxu0 0.0
  %518 = vmatpush1.xpose.msra.mxu0 0.0
  %519 = vmatprep.subr.mxu0 0.0
  %520 = vmatpush1.xpose.msra.mxu0 0.0
  %521 = vmatprep.subr.mxu0 0.0
  %522 = vmatpush1.xpose.msra.mxu0 0.0
  %523 = vmatprep.subr.mxu0 0.0
  %524 = vmatpush1.xpose.msra.mxu0 0.0
  %525 = vmatprep.subr.mxu0 0.0
  %526 = vmatpush1.xpose.msra.mxu0 0.0
  %527 = vmatprep.subr.mxu0 0.0
  %528 = vmatpush1.xpose.msra.mxu0 0.0
  %529 = vmatprep.subr.mxu0 0.0
  %530 = vmatpush1.xpose.msra.mxu0 0.0
  %531 = vmatprep.subr.mxu0 0.0
  %532 = vmatpush1.xpose.msra.mxu0 0.0
  %533 = vmatprep.subr.mxu0 0.0
  %534 = vmatpush1.xpose.msra.mxu0 0.0
  %535 = vmatprep.subr.mxu0 0.0
  %536 = vmatpush1.xpose.msra.mxu0 0.0
  %537 = vmatprep.subr.mxu0 0.0
  %538 = vmatpush1.xpose.msra.mxu0 0.0
  %539 = vmatprep.subr.mxu0 0.0
  %540 = vmatpush1.xpose.msra.mxu0 0.0
  %541 = vmatprep.subr.mxu0 0.0
  %542 = vmatpush1.xpose.msra.mxu0 0.0
  %543 = vmatprep.subr.mxu0 0.0
  %544 = vmatpush1.xpose.msra.mxu0 0.0
  %545 = vmatprep.subr.mxu0 0.0
  %546 = vmatpush1.xpose.msra.mxu0 0.0
  %547 = vmatprep.subr.mxu0 0.0
  %548 = vmatpush1.xpose.msra.mxu0 0.0
  %549 = vmatprep.subr.mxu0 0.0
  %550 = vmatpush1.xpose.msra.mxu0 0.0
  %551 = vmatprep.subr.mxu0 0.0
  %552 = vmatpush1.xpose.msra.mxu0 0.0
  %553 = vmatprep.subr.mxu0 0.0
  %554 = vmatpush1.xpose.msra.mxu0 0.0
  %555 = vmatprep.subr.mxu0 0.0
  %556 = vmatpush1.xpose.msra.mxu0 0.0
  %557 = vmatprep.subr.mxu0 0.0
  %558 = vmatpush1.xpose.msra.mxu0 0.0
  %559 = vmatprep.subr.mxu0 0.0
  %560 = vmatpush1.xpose.msra.mxu0 0.0
  %561 = vmatprep.subr.mxu0 0.0
  %562 = vmatpush1.xpose.msra.mxu0 0.0
  %563 = vmatprep.subr.mxu0 0.0
  %564 = vmatpush1.xpose.msra.mxu0 0.0
  %565 = vmatprep.subr.mxu0 0.0
  %566 = vmatpush1.xpose.msra.mxu0 0.0
  %567 = vmatprep.subr.mxu0 0.0
  %568 = vmatpush1.xpose.msra.mxu0 0.0
  %569 = vmatprep.mubr.f32.mxu0 0.0
  %570 = vmatmul.mubr.f32.gmra.mrb[0].mxu0 %v497
  %v571 = vpop.f32.mrb[0].mxu0
  %v572 = vadd.f32 0.0, %v571
  %v573 = vpop.f32.mrb[0].mxu0
  %574 = vmatprep.mubr.f32.mxu0 0.0
  %575 = vmatmul.mubr.f32.gmra.mrb[0].mxu0 %v499
  %v576 = vpop.f32.mrb[0].mxu0
  %v577 = vadd.f32 0.0, %v576
  %v578 = vpop.f32.mrb[0].mxu0
  %579 = vdwg.mxu0
  %v580 = vmul.f32 %v572, 0.35355338
  %v581 = vmul.f32 %v577, 0.35355338
  %v582 = vadd.f32 %v580, %v190
  %v583 = vadd.f32 %v581, %v191
  %v584 = vsel %vm289, %v582, -inf
  %585 = vmax.xlane.f32.xlu0 %v584
  %v586 = vpop.xlane.xlu0 %585
  %v587 = vsel %vm289, %v583, -inf
  %588 = vmax.xlane.f32.xlu0 %v587
  %v589 = vpop.xlane.xlu0 %588
  %v590 = vsub.f32 %v582, %v586
  %v591 = vsub.f32 %v583, %v589
  %v592 = vmul.f32 %v590, 1.442695
  %v593 = vpow.pop %v592
  %v594 = vmul.f32 %v591, 1.442695
  %v595 = vpow.pop %v594
  %v596 = vsel %vm289, %v593, 0.0
  %597 = vadd.xlane.f32.xlu0 %v596
  %v598 = vpop.xlane.xlu0 %597
  %v599 = vsel %vm289, %v595, 0.0
  %600 = vadd.xlane.f32.xlu0 %v599
  %v601 = vpop.xlane.xlu0 %600
  %v602 = vrcp.pop %v598
  %v603 = vrcp.pop %v601
  %v604 = vmul.f32 %v593, %v602
  %v605 = vmul.f32 %v595, %v603
  %606 = vrot.lane.b32.xlu0 %v193, 56
  %v607 = vpop.permute.xlu0 %606
  %608 = vrot.lane.b32.xlu0 %v194, 56
  %v609 = vpop.permute.xlu0 %608
  %v613 = vsel %vm289, %v604, 0
  %v616 = vsel %vm289, %v605, 0
  %618 = vmatprep.subr.mxu0 0.0
  %619 = vmatpush1.msra.mxu0 %v607
  %620 = vmatprep.subr.mxu0 0.0
  %621 = vmatpush1.msra.mxu0 %v609
  %622 = vmatprep.subr.mxu0 0.0
  %623 = vmatpush1.msra.mxu0 0.0
  %624 = vmatprep.subr.mxu0 0.0
  %625 = vmatpush1.msra.mxu0 0.0
  %626 = vmatprep.subr.mxu0 0.0
  %627 = vmatpush1.msra.mxu0 0.0
  %628 = vmatprep.subr.mxu0 0.0
  %629 = vmatpush1.msra.mxu0 0.0
  %630 = vmatprep.subr.mxu0 0.0
  %631 = vmatpush1.msra.mxu0 0.0
  %632 = vmatprep.subr.mxu0 0.0
  %633 = vmatpush1.msra.mxu0 0.0
  %634 = vmatprep.subr.mxu0 0.0
  %635 = vmatpush1.msra.mxu0 0.0
  %636 = vmatprep.subr.mxu0 0.0
  %637 = vmatpush1.msra.mxu0 0.0
  %638 = vmatprep.subr.mxu0 0.0
  %639 = vmatpush1.msra.mxu0 0.0
  %640 = vmatprep.subr.mxu0 0.0
  %641 = vmatpush1.msra.mxu0 0.0
  %642 = vmatprep.subr.mxu0 0.0
  %643 = vmatpush1.msra.mxu0 0.0
  %644 = vmatprep.subr.mxu0 0.0
  %645 = vmatpush1.msra.mxu0 0.0
  %646 = vmatprep.subr.mxu0 0.0
  %647 = vmatpush1.msra.mxu0 0.0
  %648 = vmatprep.subr.mxu0 0.0
  %649 = vmatpush1.msra.mxu0 0.0
  %650 = vmatprep.subr.mxu0 0.0
  %651 = vmatpush1.msra.mxu0 0.0
  %652 = vmatprep.subr.mxu0 0.0
  %653 = vmatpush1.msra.mxu0 0.0
  %654 = vmatprep.subr.mxu0 0.0
  %655 = vmatpush1.msra.mxu0 0.0
  %656 = vmatprep.subr.mxu0 0.0
  %657 = vmatpush1.msra.mxu0 0.0
  %658 = vmatprep.subr.mxu0 0.0
  %659 = vmatpush1.msra.mxu0 0.0
  %660 = vmatprep.subr.mxu0 0.0
  %661 = vmatpush1.msra.mxu0 0.0
  %662 = vmatprep.subr.mxu0 0.0
  %663 = vmatpush1.msra.mxu0 0.0
  %664 = vmatprep.subr.mxu0 0.0
  %665 = vmatpush1.msra.mxu0 0.0
  %666 = vmatprep.subr.mxu0 0.0
  %667 = vmatpush1.msra.mxu0 0.0
  %668 = vmatprep.subr.mxu0 0.0
  %669 = vmatpush1.msra.mxu0 0.0
  %670 = vmatprep.subr.mxu0 0.0
  %671 = vmatpush1.msra.mxu0 0.0
  %672 = vmatprep.subr.mxu0 0.0
  %673 = vmatpush1.msra.mxu0 0.0
  %674 = vmatprep.subr.mxu0 0.0
  %675 = vmatpush1.msra.mxu0 0.0
  %676 = vmatprep.subr.mxu0 0.0
  %677 = vmatpush1.msra.mxu0 0.0
  %678 = vmatprep.subr.mxu0 0.0
  %679 = vmatpush1.msra.mxu0 0.0
  %680 = vmatprep.subr.mxu0 0.0
  %681 = vmatpush1.msra.mxu0 0.0
  %682 = vmatprep.mubr.f32.mxu0 0.0
  %683 = vmatmul.mubr.f32.gmra.mrb[0].mxu0 %v613
  %v684 = vpop.f32.mrb[0].mxu0
  %v685 = vadd.f32 0.0, %v684
  %v686 = vpop.f32.mrb[0].mxu0
  %687 = vmatprep.mubr.f32.mxu0 0.0
  %688 = vmatmul.mubr.f32.gmra.mrb[0].mxu0 %v616
  %v689 = vpop.f32.mrb[0].mxu0
  %v690 = vadd.f32 0.0, %v689
  %v691 = vpop.f32.mrb[0].mxu0
  %692 = vdwg.mxu0
  %v693 = vld [vmem:[%s6 + $0x8] sm:$0xff]
  %v695 = vsel %vm201, %v685, 0
  %v698 = vsel %vm201, %v690, 0
  %700 = vmatprep.subr.mxu0 0.0
  %701 = vmatpush1.msra.mxu0 %v693
  %702 = vmatprep.subr.mxu0 0.0
  %703 = vmatpush1.msra.mxu0 0.0
  %704 = vmatprep.subr.mxu0 0.0
  %705 = vmatpush1.msra.mxu0 0.0
  %706 = vmatprep.subr.mxu0 0.0
  %707 = vmatpush1.msra.mxu0 0.0
  %708 = vmatprep.subr.mxu0 0.0
  %709 = vmatpush1.msra.mxu0 0.0
  %710 = vmatprep.subr.mxu0 0.0
  %711 = vmatpush1.msra.mxu0 0.0
  %712 = vmatprep.subr.mxu0 0.0
  %713 = vmatpush1.msra.mxu0 0.0
  %714 = vmatprep.subr.mxu0 0.0
  %715 = vmatpush1.msra.mxu0 0.0
  %716 = vmatprep.subr.mxu0 0.0
  %717 = vmatpush1.msra.mxu0 0.0
  %718 = vmatprep.subr.mxu0 0.0
  %719 = vmatpush1.msra.mxu0 0.0
  %720 = vmatprep.subr.mxu0 0.0
  %721 = vmatpush1.msra.mxu0 0.0
  %722 = vmatprep.subr.mxu0 0.0
  %723 = vmatpush1.msra.mxu0 0.0
  %724 = vmatprep.subr.mxu0 0.0
  %725 = vmatpush1.msra.mxu0 0.0
  %726 = vmatprep.subr.mxu0 0.0
  %727 = vmatpush1.msra.mxu0 0.0
  %728 = vmatprep.subr.mxu0 0.0
  %729 = vmatpush1.msra.mxu0 0.0
  %730 = vmatprep.subr.mxu0 0.0
  %731 = vmatpush1.msra.mxu0 0.0
  %732 = vmatprep.subr.mxu0 0.0
  %733 = vmatpush1.msra.mxu0 0.0
  %734 = vmatprep.subr.mxu0 0.0
  %735 = vmatpush1.msra.mxu0 0.0
  %736 = vmatprep.subr.mxu0 0.0
  %737 = vmatpush1.msra.mxu0 0.0
  %738 = vmatprep.subr.mxu0 0.0
  %739 = vmatpush1.msra.mxu0 0.0
  %740 = vmatprep.subr.mxu0 0.0
  %741 = vmatpush1.msra.mxu0 0.0
  %742 = vmatprep.subr.mxu0 0.0
  %743 = vmatpush1.msra.mxu0 0.0
  %744 = vmatprep.subr.mxu0 0.0
  %745 = vmatpush1.msra.mxu0 0.0
  %746 = vmatprep.subr.mxu0 0.0
  %747 = vmatpush1.msra.mxu0 0.0
  %748 = vmatprep.subr.mxu0 0.0
  %749 = vmatpush1.msra.mxu0 0.0
  %750 = vmatprep.subr.mxu0 0.0
  %751 = vmatpush1.msra.mxu0 0.0
  %752 = vmatprep.subr.mxu0 0.0
  %753 = vmatpush1.msra.mxu0 0.0
  %754 = vmatprep.subr.mxu0 0.0
  %755 = vmatpush1.msra.mxu0 0.0
  %756 = vmatprep.subr.mxu0 0.0
  %757 = vmatpush1.msra.mxu0 0.0
  %758 = vmatprep.subr.mxu0 0.0
  %759 = vmatpush1.msra.mxu0 0.0
  %760 = vmatprep.subr.mxu0 0.0
  %761 = vmatpush1.msra.mxu0 0.0
  %762 = vmatprep.subr.mxu0 0.0
  %763 = vmatpush1.msra.mxu0 0.0
  %764 = vmatprep.mubr.f32.mxu0 0.0
  %765 = vmatmul.mubr.f32.gmra.mrb[0].mxu0 %v695
  %v766 = vpop.f32.mrb[0].mxu0
  %v767 = vadd.f32 0.0, %v766
  %v768 = vpop.f32.mrb[0].mxu0
  %769 = vmatprep.mubr.f32.mxu0 0.0
  %770 = vmatmul.mubr.f32.gmra.mrb[0].mxu0 %v698
  %v771 = vpop.f32.mrb[0].mxu0
  %v772 = vadd.f32 0.0, %v771
  %v773 = vpop.f32.mrb[0].mxu0
  %774 = vdwg.mxu0
  %v775 = vadd.f32 %v487, %v767
  %v776 = vadd.f32 %v488, %v772
  %777 = vrot.lane.b32.xlu0 %v193, 112
  %v778 = vpop.permute.xlu0 %777
  %779 = vrot.lane.b32.xlu0 %v194, 112
  %v780 = vpop.permute.xlu0 %779
  %781 = vrot.lane.b32.xlu0 %v193, 80
  %v782 = vpop.permute.xlu0 %781
  %783 = vrot.lane.b32.xlu0 %v194, 80
  %v784 = vpop.permute.xlu0 %783
  %v785 = vsel %vm201, %v778, 0
  %v787 = vsel %vm201, %v780, 0
  %v789 = vsel %vm201, %v782, 0
  %v791 = vsel %vm201, %v784, 0
  %793 = vmatprep.subr.mxu0 0.0
  %794 = vmatpush1.xpose.msra.mxu0 %v789
  %795 = vmatprep.subr.mxu0 0.0
  %796 = vmatpush1.xpose.msra.mxu0 %v791
  %797 = vmatprep.subr.mxu0 0.0
  %798 = vmatpush1.xpose.msra.mxu0 0.0
  %799 = vmatprep.subr.mxu0 0.0
  %800 = vmatpush1.xpose.msra.mxu0 0.0
  %801 = vmatprep.subr.mxu0 0.0
  %802 = vmatpush1.xpose.msra.mxu0 0.0
  %803 = vmatprep.subr.mxu0 0.0
  %804 = vmatpush1.xpose.msra.mxu0 0.0
  %805 = vmatprep.subr.mxu0 0.0
  %806 = vmatpush1.xpose.msra.mxu0 0.0
  %807 = vmatprep.subr.mxu0 0.0
  %808 = vmatpush1.xpose.msra.mxu0 0.0
  %809 = vmatprep.subr.mxu0 0.0
  %810 = vmatpush1.xpose.msra.mxu0 0.0
  %811 = vmatprep.subr.mxu0 0.0
  %812 = vmatpush1.xpose.msra.mxu0 0.0
  %813 = vmatprep.subr.mxu0 0.0
  %814 = vmatpush1.xpose.msra.mxu0 0.0
  %815 = vmatprep.subr.mxu0 0.0
  %816 = vmatpush1.xpose.msra.mxu0 0.0
  %817 = vmatprep.subr.mxu0 0.0
  %818 = vmatpush1.xpose.msra.mxu0 0.0
  %819 = vmatprep.subr.mxu0 0.0
  %820 = vmatpush1.xpose.msra.mxu0 0.0
  %821 = vmatprep.subr.mxu0 0.0
  %822 = vmatpush1.xpose.msra.mxu0 0.0
  %823 = vmatprep.subr.mxu0 0.0
  %824 = vmatpush1.xpose.msra.mxu0 0.0
  %825 = vmatprep.subr.mxu0 0.0
  %826 = vmatpush1.xpose.msra.mxu0 0.0
  %827 = vmatprep.subr.mxu0 0.0
  %828 = vmatpush1.xpose.msra.mxu0 0.0
  %829 = vmatprep.subr.mxu0 0.0
  %830 = vmatpush1.xpose.msra.mxu0 0.0
  %831 = vmatprep.subr.mxu0 0.0
  %832 = vmatpush1.xpose.msra.mxu0 0.0
  %833 = vmatprep.subr.mxu0 0.0
  %834 = vmatpush1.xpose.msra.mxu0 0.0
  %835 = vmatprep.subr.mxu0 0.0
  %836 = vmatpush1.xpose.msra.mxu0 0.0
  %837 = vmatprep.subr.mxu0 0.0
  %838 = vmatpush1.xpose.msra.mxu0 0.0
  %839 = vmatprep.subr.mxu0 0.0
  %840 = vmatpush1.xpose.msra.mxu0 0.0
  %841 = vmatprep.subr.mxu0 0.0
  %842 = vmatpush1.xpose.msra.mxu0 0.0
  %843 = vmatprep.subr.mxu0 0.0
  %844 = vmatpush1.xpose.msra.mxu0 0.0
  %845 = vmatprep.subr.mxu0 0.0
  %846 = vmatpush1.xpose.msra.mxu0 0.0
  %847 = vmatprep.subr.mxu0 0.0
  %848 = vmatpush1.xpose.msra.mxu0 0.0
  %849 = vmatprep.subr.mxu0 0.0
  %850 = vmatpush1.xpose.msra.mxu0 0.0
  %851 = vmatprep.subr.mxu0 0.0
  %852 = vmatpush1.xpose.msra.mxu0 0.0
  %853 = vmatprep.subr.mxu0 0.0
  %854 = vmatpush1.xpose.msra.mxu0 0.0
  %855 = vmatprep.subr.mxu0 0.0
  %856 = vmatpush1.xpose.msra.mxu0 0.0
  %857 = vmatprep.mubr.f32.mxu0 0.0
  %858 = vmatmul.mubr.f32.gmra.mrb[0].mxu0 %v785
  %v859 = vpop.f32.mrb[0].mxu0
  %v860 = vadd.f32 0.0, %v859
  %v861 = vpop.f32.mrb[0].mxu0
  %862 = vmatprep.mubr.f32.mxu0 0.0
  %863 = vmatmul.mubr.f32.gmra.mrb[0].mxu0 %v787
  %v864 = vpop.f32.mrb[0].mxu0
  %v865 = vadd.f32 0.0, %v864
  %v866 = vpop.f32.mrb[0].mxu0
  %867 = vdwg.mxu0
  %v868 = vmul.f32 %v860, 0.35355338
  %v869 = vmul.f32 %v865, 0.35355338
  %v870 = vadd.f32 %v868, %v190
  %v871 = vadd.f32 %v869, %v191
  %v872 = vsel %vm289, %v870, -inf
  %873 = vmax.xlane.f32.xlu0 %v872
  %v874 = vpop.xlane.xlu0 %873
  %v875 = vsel %vm289, %v871, -inf
  %876 = vmax.xlane.f32.xlu0 %v875
  %v877 = vpop.xlane.xlu0 %876
  %v878 = vsub.f32 %v870, %v874
  %v879 = vsub.f32 %v871, %v877
  %v880 = vmul.f32 %v878, 1.442695
  %v881 = vpow.pop %v880
  %v882 = vmul.f32 %v879, 1.442695
  %v883 = vpow.pop %v882
  %v884 = vsel %vm289, %v881, 0.0
  %885 = vadd.xlane.f32.xlu0 %v884
  %v886 = vpop.xlane.xlu0 %885
  %v887 = vsel %vm289, %v883, 0.0
  %888 = vadd.xlane.f32.xlu0 %v887
  %v889 = vpop.xlane.xlu0 %888
  %v890 = vrcp.pop %v886
  %v891 = vrcp.pop %v889
  %v892 = vmul.f32 %v881, %v890
  %v893 = vmul.f32 %v883, %v891
  %894 = vrot.lane.b32.xlu0 %v193, 48
  %v895 = vpop.permute.xlu0 %894
  %896 = vrot.lane.b32.xlu0 %v194, 48
  %v897 = vpop.permute.xlu0 %896
  %v901 = vsel %vm289, %v892, 0
  %v904 = vsel %vm289, %v893, 0
  %906 = vmatprep.subr.mxu0 0.0
  %907 = vmatpush1.msra.mxu0 %v895
  %908 = vmatprep.subr.mxu0 0.0
  %909 = vmatpush1.msra.mxu0 %v897
  %910 = vmatprep.subr.mxu0 0.0
  %911 = vmatpush1.msra.mxu0 0.0
  %912 = vmatprep.subr.mxu0 0.0
  %913 = vmatpush1.msra.mxu0 0.0
  %914 = vmatprep.subr.mxu0 0.0
  %915 = vmatpush1.msra.mxu0 0.0
  %916 = vmatprep.subr.mxu0 0.0
  %917 = vmatpush1.msra.mxu0 0.0
  %918 = vmatprep.subr.mxu0 0.0
  %919 = vmatpush1.msra.mxu0 0.0
  %920 = vmatprep.subr.mxu0 0.0
  %921 = vmatpush1.msra.mxu0 0.0
  %922 = vmatprep.subr.mxu0 0.0
  %923 = vmatpush1.msra.mxu0 0.0
  %924 = vmatprep.subr.mxu0 0.0
  %925 = vmatpush1.msra.mxu0 0.0
  %926 = vmatprep.subr.mxu0 0.0
  %927 = vmatpush1.msra.mxu0 0.0
  %928 = vmatprep.subr.mxu0 0.0
  %929 = vmatpush1.msra.mxu0 0.0
  %930 = vmatprep.subr.mxu0 0.0
  %931 = vmatpush1.msra.mxu0 0.0
  %932 = vmatprep.subr.mxu0 0.0
  %933 = vmatpush1.msra.mxu0 0.0
  %934 = vmatprep.subr.mxu0 0.0
  %935 = vmatpush1.msra.mxu0 0.0
  %936 = vmatprep.subr.mxu0 0.0
  %937 = vmatpush1.msra.mxu0 0.0
  %938 = vmatprep.subr.mxu0 0.0
  %939 = vmatpush1.msra.mxu0 0.0
  %940 = vmatprep.subr.mxu0 0.0
  %941 = vmatpush1.msra.mxu0 0.0
  %942 = vmatprep.subr.mxu0 0.0
  %943 = vmatpush1.msra.mxu0 0.0
  %944 = vmatprep.subr.mxu0 0.0
  %945 = vmatpush1.msra.mxu0 0.0
  %946 = vmatprep.subr.mxu0 0.0
  %947 = vmatpush1.msra.mxu0 0.0
  %948 = vmatprep.subr.mxu0 0.0
  %949 = vmatpush1.msra.mxu0 0.0
  %950 = vmatprep.subr.mxu0 0.0
  %951 = vmatpush1.msra.mxu0 0.0
  %952 = vmatprep.subr.mxu0 0.0
  %953 = vmatpush1.msra.mxu0 0.0
  %954 = vmatprep.subr.mxu0 0.0
  %955 = vmatpush1.msra.mxu0 0.0
  %956 = vmatprep.subr.mxu0 0.0
  %957 = vmatpush1.msra.mxu0 0.0
  %958 = vmatprep.subr.mxu0 0.0
  %959 = vmatpush1.msra.mxu0 0.0
  %960 = vmatprep.subr.mxu0 0.0
  %961 = vmatpush1.msra.mxu0 0.0
  %962 = vmatprep.subr.mxu0 0.0
  %963 = vmatpush1.msra.mxu0 0.0
  %964 = vmatprep.subr.mxu0 0.0
  %965 = vmatpush1.msra.mxu0 0.0
  %966 = vmatprep.subr.mxu0 0.0
  %967 = vmatpush1.msra.mxu0 0.0
  %968 = vmatprep.subr.mxu0 0.0
  %969 = vmatpush1.msra.mxu0 0.0
  %970 = vmatprep.mubr.f32.mxu0 0.0
  %971 = vmatmul.mubr.f32.gmra.mrb[0].mxu0 %v901
  %v972 = vpop.f32.mrb[0].mxu0
  %v973 = vadd.f32 0.0, %v972
  %v974 = vpop.f32.mrb[0].mxu0
  %975 = vmatprep.mubr.f32.mxu0 0.0
  %976 = vmatmul.mubr.f32.gmra.mrb[0].mxu0 %v904
  %v977 = vpop.f32.mrb[0].mxu0
  %v978 = vadd.f32 0.0, %v977
  %v979 = vpop.f32.mrb[0].mxu0
  %980 = vdwg.mxu0
  %v981 = vld [vmem:[%s6 + $0x10] sm:$0xff]
  %v983 = vsel %vm201, %v973, 0
  %v986 = vsel %vm201, %v978, 0
  %988 = vmatprep.subr.mxu0 0.0
  %989 = vmatpush1.msra.mxu0 %v981
  %990 = vmatprep.subr.mxu0 0.0
  %991 = vmatpush1.msra.mxu0 0.0
  %992 = vmatprep.subr.mxu0 0.0
  %993 = vmatpush1.msra.mxu0 0.0
  %994 = vmatprep.subr.mxu0 0.0
  %995 = vmatpush1.msra.mxu0 0.0
  %996 = vmatprep.subr.mxu0 0.0
  %997 = vmatpush1.msra.mxu0 0.0
  %998 = vmatprep.subr.mxu0 0.0
  %999 = vmatpush1.msra.mxu0 0.0
  %1000 = vmatprep.subr.mxu0 0.0
  %1001 = vmatpush1.msra.mxu0 0.0
  %1002 = vmatprep.subr.mxu0 0.0
  %1003 = vmatpush1.msra.mxu0 0.0
  %1004 = vmatprep.subr.mxu0 0.0
  %1005 = vmatpush1.msra.mxu0 0.0
  %1006 = vmatprep.subr.mxu0 0.0
  %1007 = vmatpush1.msra.mxu0 0.0
  %1008 = vmatprep.subr.mxu0 0.0
  %1009 = vmatpush1.msra.mxu0 0.0
  %1010 = vmatprep.subr.mxu0 0.0
  %1011 = vmatpush1.msra.mxu0 0.0
  %1012 = vmatprep.subr.mxu0 0.0
  %1013 = vmatpush1.msra.mxu0 0.0
  %1014 = vmatprep.subr.mxu0 0.0
  %1015 = vmatpush1.msra.mxu0 0.0
  %1016 = vmatprep.subr.mxu0 0.0
  %1017 = vmatpush1.msra.mxu0 0.0
  %1018 = vmatprep.subr.mxu0 0.0
  %1019 = vmatpush1.msra.mxu0 0.0
  %1020 = vmatprep.subr.mxu0 0.0
  %1021 = vmatpush1.msra.mxu0 0.0
  %1022 = vmatprep.subr.mxu0 0.0
  %1023 = vmatpush1.msra.mxu0 0.0
  %1024 = vmatprep.subr.mxu0 0.0
  %1025 = vmatpush1.msra.mxu0 0.0
  %1026 = vmatprep.subr.mxu0 0.0
  %1027 = vmatpush1.msra.mxu0 0.0
  %1028 = vmatprep.subr.mxu0 0.0
  %1029 = vmatpush1.msra.mxu0 0.0
  %1030 = vmatprep.subr.mxu0 0.0
  %1031 = vmatpush1.msra.mxu0 0.0
  %1032 = vmatprep.subr.mxu0 0.0
  %1033 = vmatpush1.msra.mxu0 0.0
  %1034 = vmatprep.subr.mxu0 0.0
  %1035 = vmatpush1.msra.mxu0 0.0
  %1036 = vmatprep.subr.mxu0 0.0
  %1037 = vmatpush1.msra.mxu0 0.0
  %1038 = vmatprep.subr.mxu0 0.0
  %1039 = vmatpush1.msra.mxu0 0.0
  %1040 = vmatprep.subr.mxu0 0.0
  %1041 = vmatpush1.msra.mxu0 0.0
  %1042 = vmatprep.subr.mxu0 0.0
  %1043 = vmatpush1.msra.mxu0 0.0
  %1044 = vmatprep.subr.mxu0 0.0
  %1045 = vmatpush1.msra.mxu0 0.0
  %1046 = vmatprep.subr.mxu0 0.0
  %1047 = vmatpush1.msra.mxu0 0.0
  %1048 = vmatprep.subr.mxu0 0.0
  %1049 = vmatpush1.msra.mxu0 0.0
  %1050 = vmatprep.subr.mxu0 0.0
  %1051 = vmatpush1.msra.mxu0 0.0
  %1052 = vmatprep.mubr.f32.mxu0 0.0
  %1053 = vmatmul.mubr.f32.gmra.mrb[0].mxu0 %v983
  %v1054 = vpop.f32.mrb[0].mxu0
  %v1055 = vadd.f32 0.0, %v1054
  %v1056 = vpop.f32.mrb[0].mxu0
  %1057 = vmatprep.mubr.f32.mxu0 0.0
  %1058 = vmatmul.mubr.f32.gmra.mrb[0].mxu0 %v986
  %v1059 = vpop.f32.mrb[0].mxu0
  %v1060 = vadd.f32 0.0, %v1059
  %v1061 = vpop.f32.mrb[0].mxu0
  %1062 = vdwg.mxu0
  %v1063 = vadd.f32 %v775, %v1055
  %v1064 = vadd.f32 %v776, %v1060
  %1065 = vrot.lane.b32.xlu0 %v193, 104
  %v1066 = vpop.permute.xlu0 %1065
  %1067 = vrot.lane.b32.xlu0 %v194, 104
  %v1068 = vpop.permute.xlu0 %1067
  %1069 = vrot.lane.b32.xlu0 %v193, 72
  %v1070 = vpop.permute.xlu0 %1069
  %1071 = vrot.lane.b32.xlu0 %v194, 72
  %v1072 = vpop.permute.xlu0 %1071
  %v1073 = vsel %vm201, %v1066, 0
  %v1075 = vsel %vm201, %v1068, 0
  %v1077 = vsel %vm201, %v1070, 0
  %v1079 = vsel %vm201, %v1072, 0
  %1081 = vmatprep.subr.mxu0 0.0
  %1082 = vmatpush1.xpose.msra.mxu0 %v1077
  %1083 = vmatprep.subr.mxu0 0.0
  %1084 = vmatpush1.xpose.msra.mxu0 %v1079
  %1085 = vmatprep.subr.mxu0 0.0
  %1086 = vmatpush1.xpose.msra.mxu0 0.0
  %1087 = vmatprep.subr.mxu0 0.0
  %1088 = vmatpush1.xpose.msra.mxu0 0.0
  %1089 = vmatprep.subr.mxu0 0.0
  %1090 = vmatpush1.xpose.msra.mxu0 0.0
  %1091 = vmatprep.subr.mxu0 0.0
  %1092 = vmatpush1.xpose.msra.mxu0 0.0
  %1093 = vmatprep.subr.mxu0 0.0
  %1094 = vmatpush1.xpose.msra.mxu0 0.0
  %1095 = vmatprep.subr.mxu0 0.0
  %1096 = vmatpush1.xpose.msra.mxu0 0.0
  %1097 = vmatprep.subr.mxu0 0.0
  %1098 = vmatpush1.xpose.msra.mxu0 0.0
  %1099 = vmatprep.subr.mxu0 0.0
  %1100 = vmatpush1.xpose.msra.mxu0 0.0
  %1101 = vmatprep.subr.mxu0 0.0
  %1102 = vmatpush1.xpose.msra.mxu0 0.0
  %1103 = vmatprep.subr.mxu0 0.0
  %1104 = vmatpush1.xpose.msra.mxu0 0.0
  %1105 = vmatprep.subr.mxu0 0.0
  %1106 = vmatpush1.xpose.msra.mxu0 0.0
  %1107 = vmatprep.subr.mxu0 0.0
  %1108 = vmatpush1.xpose.msra.mxu0 0.0
  %1109 = vmatprep.subr.mxu0 0.0
  %1110 = vmatpush1.xpose.msra.mxu0 0.0
  %1111 = vmatprep.subr.mxu0 0.0
  %1112 = vmatpush1.xpose.msra.mxu0 0.0
  %1113 = vmatprep.subr.mxu0 0.0
  %1114 = vmatpush1.xpose.msra.mxu0 0.0
  %1115 = vmatprep.subr.mxu0 0.0
  %1116 = vmatpush1.xpose.msra.mxu0 0.0
  %1117 = vmatprep.subr.mxu0 0.0
  %1118 = vmatpush1.xpose.msra.mxu0 0.0
  %1119 = vmatprep.subr.mxu0 0.0
  %1120 = vmatpush1.xpose.msra.mxu0 0.0
  %1121 = vmatprep.subr.mxu0 0.0
  %1122 = vmatpush1.xpose.msra.mxu0 0.0
  %1123 = vmatprep.subr.mxu0 0.0
  %1124 = vmatpush1.xpose.msra.mxu0 0.0
  %1125 = vmatprep.subr.mxu0 0.0
  %1126 = vmatpush1.xpose.msra.mxu0 0.0
  %1127 = vmatprep.subr.mxu0 0.0
  %1128 = vmatpush1.xpose.msra.mxu0 0.0
  %1129 = vmatprep.subr.mxu0 0.0
  %1130 = vmatpush1.xpose.msra.mxu0 0.0
  %1131 = vmatprep.subr.mxu0 0.0
  %1132 = vmatpush1.xpose.msra.mxu0 0.0
  %1133 = vmatprep.subr.mxu0 0.0
  %1134 = vmatpush1.xpose.msra.mxu0 0.0
  %1135 = vmatprep.subr.mxu0 0.0
  %1136 = vmatpush1.xpose.msra.mxu0 0.0
  %1137 = vmatprep.subr.mxu0 0.0
  %1138 = vmatpush1.xpose.msra.mxu0 0.0
  %1139 = vmatprep.subr.mxu0 0.0
  %1140 = vmatpush1.xpose.msra.mxu0 0.0
  %1141 = vmatprep.subr.mxu0 0.0
  %1142 = vmatpush1.xpose.msra.mxu0 0.0
  %1143 = vmatprep.subr.mxu0 0.0
  %1144 = vmatpush1.xpose.msra.mxu0 0.0
  %1145 = vmatprep.mubr.f32.mxu0 0.0
  %1146 = vmatmul.mubr.f32.gmra.mrb[0].mxu0 %v1073
  %v1147 = vpop.f32.mrb[0].mxu0
  %v1148 = vadd.f32 0.0, %v1147
  %v1149 = vpop.f32.mrb[0].mxu0
  %1150 = vmatprep.mubr.f32.mxu0 0.0
  %1151 = vmatmul.mubr.f32.gmra.mrb[0].mxu0 %v1075
  %v1152 = vpop.f32.mrb[0].mxu0
  %v1153 = vadd.f32 0.0, %v1152
  %v1154 = vpop.f32.mrb[0].mxu0
  %1155 = vdwg.mxu0
  %v1156 = vmul.f32 %v1148, 0.35355338
  %v1157 = vmul.f32 %v1153, 0.35355338
  %v1158 = vadd.f32 %v1156, %v190
  %v1159 = vadd.f32 %v1157, %v191
  %v1160 = vsel %vm289, %v1158, -inf
  %1161 = vmax.xlane.f32.xlu0 %v1160
  %v1162 = vpop.xlane.xlu0 %1161
  %v1163 = vsel %vm289, %v1159, -inf
  %1164 = vmax.xlane.f32.xlu0 %v1163
  %v1165 = vpop.xlane.xlu0 %1164
  %v1166 = vsub.f32 %v1158, %v1162
  %v1167 = vsub.f32 %v1159, %v1165
  %v1168 = vmul.f32 %v1166, 1.442695
  %v1169 = vpow.pop %v1168
  %v1170 = vmul.f32 %v1167, 1.442695
  %v1171 = vpow.pop %v1170
  %v1172 = vsel %vm289, %v1169, 0.0
  %1173 = vadd.xlane.f32.xlu0 %v1172
  %v1174 = vpop.xlane.xlu0 %1173
  %v1175 = vsel %vm289, %v1171, 0.0
  %1176 = vadd.xlane.f32.xlu0 %v1175
  %v1177 = vpop.xlane.xlu0 %1176
  %v1178 = vrcp.pop %v1174
  %v1179 = vrcp.pop %v1177
  %v1180 = vmul.f32 %v1169, %v1178
  %v1181 = vmul.f32 %v1171, %v1179
  %1182 = vrot.lane.b32.xlu0 %v193, 40
  %v1183 = vpop.permute.xlu0 %1182
  %1184 = vrot.lane.b32.xlu0 %v194, 40
  %v1185 = vpop.permute.xlu0 %1184
  %v1189 = vsel %vm289, %v1180, 0
  %v1192 = vsel %vm289, %v1181, 0
  %1194 = vmatprep.subr.mxu0 0.0
  %1195 = vmatpush1.msra.mxu0 %v1183
  %1196 = vmatprep.subr.mxu0 0.0
  %1197 = vmatpush1.msra.mxu0 %v1185
  %1198 = vmatprep.subr.mxu0 0.0
  %1199 = vmatpush1.msra.mxu0 0.0
  %1200 = vmatprep.subr.mxu0 0.0
  %1201 = vmatpush1.msra.mxu0 0.0
  %1202 = vmatprep.subr.mxu0 0.0
  %1203 = vmatpush1.msra.mxu0 0.0
  %1204 = vmatprep.subr.mxu0 0.0
  %1205 = vmatpush1.msra.mxu0 0.0
  %1206 = vmatprep.subr.mxu0 0.0
  %1207 = vmatpush1.msra.mxu0 0.0
  %1208 = vmatprep.subr.mxu0 0.0
  %1209 = vmatpush1.msra.mxu0 0.0
  %1210 = vmatprep.subr.mxu0 0.0
  %1211 = vmatpush1.msra.mxu0 0.0
  %1212 = vmatprep.subr.mxu0 0.0
  %1213 = vmatpush1.msra.mxu0 0.0
  %1214 = vmatprep.subr.mxu0 0.0
  %1215 = vmatpush1.msra.mxu0 0.0
  %1216 = vmatprep.subr.mxu0 0.0
  %1217 = vmatpush1.msra.mxu0 0.0
  %1218 = vmatprep.subr.mxu0 0.0
  %1219 = vmatpush1.msra.mxu0 0.0
  %1220 = vmatprep.subr.mxu0 0.0
  %1221 = vmatpush1.msra.mxu0 0.0
  %1222 = vmatprep.subr.mxu0 0.0
  %1223 = vmatpush1.msra.mxu0 0.0
  %1224 = vmatprep.subr.mxu0 0.0
  %1225 = vmatpush1.msra.mxu0 0.0
  %1226 = vmatprep.subr.mxu0 0.0
  %1227 = vmatpush1.msra.mxu0 0.0
  %1228 = vmatprep.subr.mxu0 0.0
  %1229 = vmatpush1.msra.mxu0 0.0
  %1230 = vmatprep.subr.mxu0 0.0
  %1231 = vmatpush1.msra.mxu0 0.0
  %1232 = vmatprep.subr.mxu0 0.0
  %1233 = vmatpush1.msra.mxu0 0.0
  %1234 = vmatprep.subr.mxu0 0.0
  %1235 = vmatpush1.msra.mxu0 0.0
  %1236 = vmatprep.subr.mxu0 0.0
  %1237 = vmatpush1.msra.mxu0 0.0
  %1238 = vmatprep.subr.mxu0 0.0
  %1239 = vmatpush1.msra.mxu0 0.0
  %1240 = vmatprep.subr.mxu0 0.0
  %1241 = vmatpush1.msra.mxu0 0.0
  %1242 = vmatprep.subr.mxu0 0.0
  %1243 = vmatpush1.msra.mxu0 0.0
  %1244 = vmatprep.subr.mxu0 0.0
  %1245 = vmatpush1.msra.mxu0 0.0
  %1246 = vmatprep.subr.mxu0 0.0
  %1247 = vmatpush1.msra.mxu0 0.0
  %1248 = vmatprep.subr.mxu0 0.0
  %1249 = vmatpush1.msra.mxu0 0.0
  %1250 = vmatprep.subr.mxu0 0.0
  %1251 = vmatpush1.msra.mxu0 0.0
  %1252 = vmatprep.subr.mxu0 0.0
  %1253 = vmatpush1.msra.mxu0 0.0
  %1254 = vmatprep.subr.mxu0 0.0
  %1255 = vmatpush1.msra.mxu0 0.0
  %1256 = vmatprep.subr.mxu0 0.0
  %1257 = vmatpush1.msra.mxu0 0.0
  %1258 = vmatprep.mubr.f32.mxu0 0.0
  %1259 = vmatmul.mubr.f32.gmra.mrb[0].mxu0 %v1189
  %v1260 = vpop.f32.mrb[0].mxu0
  %v1261 = vadd.f32 0.0, %v1260
  %v1262 = vpop.f32.mrb[0].mxu0
  %1263 = vmatprep.mubr.f32.mxu0 0.0
  %1264 = vmatmul.mubr.f32.gmra.mrb[0].mxu0 %v1192
  %v1265 = vpop.f32.mrb[0].mxu0
  %v1266 = vadd.f32 0.0, %v1265
  %v1267 = vpop.f32.mrb[0].mxu0
  %1268 = vdwg.mxu0
  %v1269 = vld [vmem:[%s6 + $0x18] sm:$0xff]
  %v1271 = vsel %vm201, %v1261, 0
  %v1274 = vsel %vm201, %v1266, 0
  %1276 = vmatprep.subr.mxu0 0.0
  %1277 = vmatpush1.msra.mxu0 %v1269
  %1278 = vmatprep.subr.mxu0 0.0
  %1279 = vmatpush1.msra.mxu0 0.0
  %1280 = vmatprep.subr.mxu0 0.0
  %1281 = vmatpush1.msra.mxu0 0.0
  %1282 = vmatprep.subr.mxu0 0.0
  %1283 = vmatpush1.msra.mxu0 0.0
  %1284 = vmatprep.subr.mxu0 0.0
  %1285 = vmatpush1.msra.mxu0 0.0
  %1286 = vmatprep.subr.mxu0 0.0
  %1287 = vmatpush1.msra.mxu0 0.0
  %1288 = vmatprep.subr.mxu0 0.0
  %1289 = vmatpush1.msra.mxu0 0.0
  %1290 = vmatprep.subr.mxu0 0.0
  %1291 = vmatpush1.msra.mxu0 0.0
  %1292 = vmatprep.subr.mxu0 0.0
  %1293 = vmatpush1.msra.mxu0 0.0
  %1294 = vmatprep.subr.mxu0 0.0
  %1295 = vmatpush1.msra.mxu0 0.0
  %1296 = vmatprep.subr.mxu0 0.0
  %1297 = vmatpush1.msra.mxu0 0.0
  %1298 = vmatprep.subr.mxu0 0.0
  %1299 = vmatpush1.msra.mxu0 0.0
  %1300 = vmatprep.subr.mxu0 0.0
  %1301 = vmatpush1.msra.mxu0 0.0
  %1302 = vmatprep.subr.mxu0 0.0
  %1303 = vmatpush1.msra.mxu0 0.0
  %1304 = vmatprep.subr.mxu0 0.0
  %1305 = vmatpush1.msra.mxu0 0.0
  %1306 = vmatprep.subr.mxu0 0.0
  %1307 = vmatpush1.msra.mxu0 0.0
  %1308 = vmatprep.subr.mxu0 0.0
  %1309 = vmatpush1.msra.mxu0 0.0
  %1310 = vmatprep.subr.mxu0 0.0
  %1311 = vmatpush1.msra.mxu0 0.0
  %1312 = vmatprep.subr.mxu0 0.0
  %1313 = vmatpush1.msra.mxu0 0.0
  %1314 = vmatprep.subr.mxu0 0.0
  %1315 = vmatpush1.msra.mxu0 0.0
  %1316 = vmatprep.subr.mxu0 0.0
  %1317 = vmatpush1.msra.mxu0 0.0
  %1318 = vmatprep.subr.mxu0 0.0
  %1319 = vmatpush1.msra.mxu0 0.0
  %1320 = vmatprep.subr.mxu0 0.0
  %1321 = vmatpush1.msra.mxu0 0.0
  %1322 = vmatprep.subr.mxu0 0.0
  %1323 = vmatpush1.msra.mxu0 0.0
  %1324 = vmatprep.subr.mxu0 0.0
  %1325 = vmatpush1.msra.mxu0 0.0
  %1326 = vmatprep.subr.mxu0 0.0
  %1327 = vmatpush1.msra.mxu0 0.0
  %1328 = vmatprep.subr.mxu0 0.0
  %1329 = vmatpush1.msra.mxu0 0.0
  %1330 = vmatprep.subr.mxu0 0.0
  %1331 = vmatpush1.msra.mxu0 0.0
  %1332 = vmatprep.subr.mxu0 0.0
  %1333 = vmatpush1.msra.mxu0 0.0
  %1334 = vmatprep.subr.mxu0 0.0
  %1335 = vmatpush1.msra.mxu0 0.0
  %1336 = vmatprep.subr.mxu0 0.0
  %1337 = vmatpush1.msra.mxu0 0.0
  %1338 = vmatprep.subr.mxu0 0.0
  %1339 = vmatpush1.msra.mxu0 0.0
  %1340 = vmatprep.mubr.f32.mxu0 0.0
  %1341 = vmatmul.mubr.f32.gmra.mrb[0].mxu0 %v1271
  %v1342 = vpop.f32.mrb[0].mxu0
  %v1343 = vadd.f32 0.0, %v1342
  %v1344 = vpop.f32.mrb[0].mxu0
  %1345 = vmatprep.mubr.f32.mxu0 0.0
  %1346 = vmatmul.mubr.f32.gmra.mrb[0].mxu0 %v1274
  %v1347 = vpop.f32.mrb[0].mxu0
  %v1348 = vadd.f32 0.0, %v1347
  %v1349 = vpop.f32.mrb[0].mxu0
  %1350 = vdwg.mxu0
  %v1351 = vadd.f32 %v1063, %v1343
  %v1352 = vadd.f32 %v1064, %v1348
  %v1353 = vadd.f32 %v47, %v1351
  %v1354 = vadd.f32 %v48, %v1352
  %v1355 = vld [vmem:[%s8] sm:$0x1]
  %v1356 = vld [vmem:[%s9] sm:$0x1]
  %v1357 = vsel %vm51, %v1353, 0.0
  %1358 = vadd.xlane.f32.xlu0 %v1357
  %v1359 = vpop.xlane.xlu0 %1358
  %v1360 = vsel %vm51, %v1354, 0.0
  %1361 = vadd.xlane.f32.xlu0 %v1360
  %v1362 = vpop.xlane.xlu0 %1361
  %v1363 = vmul.f32 %v1359, %v58
  %v1364 = vmul.f32 %v1362, %v58
  %v1365 = vsub.f32 %v1353, %v1363
  %v1366 = vsub.f32 %v1354, %v1364
  %v1367 = vmul.f32 %v1365, %v1365
  %v1368 = vmul.f32 %v1366, %v1366
  %v1369 = vsel %vm51, %v1367, 0.0
  %1370 = vadd.xlane.f32.xlu0 %v1369
  %v1371 = vpop.xlane.xlu0 %1370
  %v1372 = vsel %vm51, %v1368, 0.0
  %1373 = vadd.xlane.f32.xlu0 %v1372
  %v1374 = vpop.xlane.xlu0 %1373
  %v1375 = vmul.f32 %v1371, %v58
  %v1376 = vmul.f32 %v1374, %v58
  %v1377 = vadd.f32 %v1375, 1e-05
  %v1378 = vadd.f32 %v1376, 1e-05
  %v1379 = vrsqrt.pop %v1377
  %v1380 = vrsqrt.pop %v1378
  %v1381 = vmul.f32 %v1365, %v1379
  %v1382 = vmul.f32 %v1366, %v1380
  %v1384 = vlaneseq
  %v1385 = vshrl.u32 %v1384, 7
  %v1386 = vsub.s32 0, %v1385
  %v1387 = vrot.slane %v1355, %v1386
  %v1389 = vmul.f32 %v1381, %v1387
  %v1390 = vmul.f32 %v1382, %v1387
  %v1392 = vlaneseq
  %v1393 = vshrl.u32 %v1392, 7
  %v1394 = vsub.s32 0, %v1393
  %v1395 = vrot.slane %v1356, %v1394
  %v1397 = vadd.f32 %v1389, %v1395
  %v1398 = vadd.f32 %v1390, %v1395
  %v1399 = vld [vmem:[%s10] sm:$0xff]
  %v1400 = vld [vmem:[%s10 + $0x8] sm:$0xff]
  %v1401 = vld [vmem:[%s10 + $0x10] sm:$0xff]
  %v1402 = vld [vmem:[%s10 + $0x18] sm:$0xff]
  %v1403 = vld [vmem:[%s11] sm:$0x1]
  %v1405 = vlaneseq
  %v1406 = vshrl.u32 %v1405, 7
  %v1407 = vsub.s32 0, %v1406
  %v1408 = vrot.slane %v1403, %v1407
  %v1411 = vsel %vm51, %v1397, 0
  %v1414 = vsel %vm51, %v1398, 0
  %1416 = vmatprep.subr.mxu0 0.0
  %1417 = vmatpush1.msra.mxu0 %v1399
  %1418 = vmatprep.subr.mxu0 0.0
  %1419 = vmatpush1.msra.mxu0 %v1400
  %1420 = vmatprep.subr.mxu0 0.0
  %1421 = vmatpush1.msra.mxu0 %v1401
  %1422 = vmatprep.subr.mxu0 0.0
  %1423 = vmatpush1.msra.mxu0 %v1402
  %1424 = vmatprep.subr.mxu0 0.0
  %1425 = vmatpush1.msra.mxu0 0.0
  %1426 = vmatprep.subr.mxu0 0.0
  %1427 = vmatpush1.msra.mxu0 0.0
  %1428 = vmatprep.subr.mxu0 0.0
  %1429 = vmatpush1.msra.mxu0 0.0
  %1430 = vmatprep.subr.mxu0 0.0
  %1431 = vmatpush1.msra.mxu0 0.0
  %1432 = vmatprep.subr.mxu0 0.0
  %1433 = vmatpush1.msra.mxu0 0.0
  %1434 = vmatprep.subr.mxu0 0.0
  %1435 = vmatpush1.msra.mxu0 0.0
  %1436 = vmatprep.subr.mxu0 0.0
  %1437 = vmatpush1.msra.mxu0 0.0
  %1438 = vmatprep.subr.mxu0 0.0
  %1439 = vmatpush1.msra.mxu0 0.0
  %1440 = vmatprep.subr.mxu0 0.0
  %1441 = vmatpush1.msra.mxu0 0.0
  %1442 = vmatprep.subr.mxu0 0.0
  %1443 = vmatpush1.msra.mxu0 0.0
  %1444 = vmatprep.subr.mxu0 0.0
  %1445 = vmatpush1.msra.mxu0 0.0
  %1446 = vmatprep.subr.mxu0 0.0
  %1447 = vmatpush1.msra.mxu0 0.0
  %1448 = vmatprep.subr.mxu0 0.0
  %1449 = vmatpush1.msra.mxu0 0.0
  %1450 = vmatprep.subr.mxu0 0.0
  %1451 = vmatpush1.msra.mxu0 0.0
  %1452 = vmatprep.subr.mxu0 0.0
  %1453 = vmatpush1.msra.mxu0 0.0
  %1454 = vmatprep.subr.mxu0 0.0
  %1455 = vmatpush1.msra.mxu0 0.0
  %1456 = vmatprep.subr.mxu0 0.0
  %1457 = vmatpush1.msra.mxu0 0.0
  %1458 = vmatprep.subr.mxu0 0.0
  %1459 = vmatpush1.msra.mxu0 0.0
  %1460 = vmatprep.subr.mxu0 0.0
  %1461 = vmatpush1.msra.mxu0 0.0
  %1462 = vmatprep.subr.mxu0 0.0
  %1463 = vmatpush1.msra.mxu0 0.0
  %1464 = vmatprep.subr.mxu0 0.0
  %1465 = vmatpush1.msra.mxu0 0.0
  %1466 = vmatprep.subr.mxu0 0.0
  %1467 = vmatpush1.msra.mxu0 0.0
  %1468 = vmatprep.subr.mxu0 0.0
  %1469 = vmatpush1.msra.mxu0 0.0
  %1470 = vmatprep.subr.mxu0 0.0
  %1471 = vmatpush1.msra.mxu0 0.0
  %1472 = vmatprep.subr.mxu0 0.0
  %1473 = vmatpush1.msra.mxu0 0.0
  %1474 = vmatprep.subr.mxu0 0.0
  %1475 = vmatpush1.msra.mxu0 0.0
  %1476 = vmatprep.subr.mxu0 0.0
  %1477 = vmatpush1.msra.mxu0 0.0
  %1478 = vmatprep.subr.mxu0 0.0
  %1479 = vmatpush1.msra.mxu0 0.0
  %1480 = vmatprep.mubr.f32.mxu0 0.0
  %1481 = vmatmul.mubr.f32.gmra.mrb[0].mxu0 %v1411
  %v1482 = vpop.f32.mrb[0].mxu0
  %v1483 = vadd.f32 %v1408, %v1482
  %v1484 = vpop.f32.mrb[0].mxu0
  %1485 = vmatprep.mubr.f32.mxu0 0.0
  %1486 = vmatmul.mubr.f32.gmra.mrb[0].mxu0 %v1414
  %v1487 = vpop.f32.mrb[0].mxu0
  %v1488 = vadd.f32 %v1408, %v1487
  %v1489 = vpop.f32.mrb[0].mxu0
  %1490 = vdwg.mxu0
  %v1491 = vmul.f32 %v1483, 0.5
  %v1492 = vmul.f32 %v1488, 0.5
  %v1493 = vmul.f32 %v1483, 0.044715
  %v1494 = vmul.f32 %v1488, 0.044715
  %v1495 = vmul.f32 %v1493, %v1483
  %v1496 = vmul.f32 %v1494, %v1488
  %v1497 = vmul.f32 %v1495, %v1483
  %v1498 = vmul.f32 %v1496, %v1488
  %v1499 = vadd.f32 %v1483, %v1497
  %v1500 = vadd.f32 %v1488, %v1498
  %v1501 = vmul.f32 %v1499, 0.7978846
  %v1502 = vmul.f32 %v1500, 0.7978846
  %v1503 = vtanh.pop %v1501
  %v1504 = vtanh.pop %v1502
  %v1505 = vadd.f32 %v1503, 1.0
  %v1506 = vadd.f32 %v1504, 1.0
  %v1507 = vmul.f32 %v1491, %v1505
  %v1508 = vmul.f32 %v1492, %v1506
  %v1509 = vld [vmem:[%s12] sm:$0xff]
  %v1510 = vld [vmem:[%s12 + $0x8] sm:$0xff]
  %v1511 = vld [vmem:[%s12 + $0x10] sm:$0xff]
  %v1512 = vld [vmem:[%s12 + $0x18] sm:$0xff]
  %v1513 = vld [vmem:[%s12 + $0x20] sm:$0xff]
  %v1514 = vld [vmem:[%s12 + $0x28] sm:$0xff]
  %v1515 = vld [vmem:[%s12 + $0x30] sm:$0xff]
  %v1516 = vld [vmem:[%s12 + $0x38] sm:$0xff]
  %v1517 = vld [vmem:[%s12 + $0x40] sm:$0xff]
  %v1518 = vld [vmem:[%s12 + $0x48] sm:$0xff]
  %v1519 = vld [vmem:[%s12 + $0x50] sm:$0xff]
  %v1520 = vld [vmem:[%s12 + $0x58] sm:$0xff]
  %v1521 = vld [vmem:[%s12 + $0x60] sm:$0xff]
  %v1522 = vld [vmem:[%s12 + $0x68] sm:$0xff]
  %v1523 = vld [vmem:[%s12 + $0x70] sm:$0xff]
  %v1524 = vld [vmem:[%s12 + $0x78] sm:$0xff]
  %v1525 = vld [vmem:[%s13] sm:$0x1]
  %v1527 = vlaneseq
  %v1528 = vshrl.u32 %v1527, 7
  %v1529 = vsub.s32 0, %v1528
  %v1530 = vrot.slane %v1525, %v1529
  %1532 = vmatprep.subr.mxu0 0.0
  %1533 = vmatpush1.msra.mxu0 %v1509
  %1534 = vmatprep.subr.mxu0 0.0
  %1535 = vmatpush1.msra.mxu0 %v1510
  %1536 = vmatprep.subr.mxu0 0.0
  %1537 = vmatpush1.msra.mxu0 %v1511
  %1538 = vmatprep.subr.mxu0 0.0
  %1539 = vmatpush1.msra.mxu0 %v1512
  %1540 = vmatprep.subr.mxu0 0.0
  %1541 = vmatpush1.msra.mxu0 %v1513
  %1542 = vmatprep.subr.mxu0 0.0
  %1543 = vmatpush1.msra.mxu0 %v1514
  %1544 = vmatprep.subr.mxu0 0.0
  %1545 = vmatpush1.msra.mxu0 %v1515
  %1546 = vmatprep.subr.mxu0 0.0
  %1547 = vmatpush1.msra.mxu0 %v1516
  %1548 = vmatprep.subr.mxu0 0.0
  %1549 = vmatpush1.msra.mxu0 %v1517
  %1550 = vmatprep.subr.mxu0 0.0
  %1551 = vmatpush1.msra.mxu0 %v1518
  %1552 = vmatprep.subr.mxu0 0.0
  %1553 = vmatpush1.msra.mxu0 %v1519
  %1554 = vmatprep.subr.mxu0 0.0
  %1555 = vmatpush1.msra.mxu0 %v1520
  %1556 = vmatprep.subr.mxu0 0.0
  %1557 = vmatpush1.msra.mxu0 %v1521
  %1558 = vmatprep.subr.mxu0 0.0
  %1559 = vmatpush1.msra.mxu0 %v1522
  %1560 = vmatprep.subr.mxu0 0.0
  %1561 = vmatpush1.msra.mxu0 %v1523
  %1562 = vmatprep.subr.mxu0 0.0
  %1563 = vmatpush1.msra.mxu0 %v1524
  %1564 = vmatprep.subr.mxu0 0.0
  %1565 = vmatpush1.msra.mxu0 0.0
  %1566 = vmatprep.subr.mxu0 0.0
  %1567 = vmatpush1.msra.mxu0 0.0
  %1568 = vmatprep.subr.mxu0 0.0
  %1569 = vmatpush1.msra.mxu0 0.0
  %1570 = vmatprep.subr.mxu0 0.0
  %1571 = vmatpush1.msra.mxu0 0.0
  %1572 = vmatprep.subr.mxu0 0.0
  %1573 = vmatpush1.msra.mxu0 0.0
  %1574 = vmatprep.subr.mxu0 0.0
  %1575 = vmatpush1.msra.mxu0 0.0
  %1576 = vmatprep.subr.mxu0 0.0
  %1577 = vmatpush1.msra.mxu0 0.0
  %1578 = vmatprep.subr.mxu0 0.0
  %1579 = vmatpush1.msra.mxu0 0.0
  %1580 = vmatprep.subr.mxu0 0.0
  %1581 = vmatpush1.msra.mxu0 0.0
  %1582 = vmatprep.subr.mxu0 0.0
  %1583 = vmatpush1.msra.mxu0 0.0
  %1584 = vmatprep.subr.mxu0 0.0
  %1585 = vmatpush1.msra.mxu0 0.0
  %1586 = vmatprep.subr.mxu0 0.0
  %1587 = vmatpush1.msra.mxu0 0.0
  %1588 = vmatprep.subr.mxu0 0.0
  %1589 = vmatpush1.msra.mxu0 0.0
  %1590 = vmatprep.subr.mxu0 0.0
  %1591 = vmatpush1.msra.mxu0 0.0
  %1592 = vmatprep.subr.mxu0 0.0
  %1593 = vmatpush1.msra.mxu0 0.0
  %1594 = vmatprep.subr.mxu0 0.0
  %1595 = vmatpush1.msra.mxu0 0.0
  %1596 = vmatprep.mubr.f32.mxu0 0.0
  %1597 = vmatmul.mubr.f32.gmra.mrb[0].mxu0 %v1507
  %v1598 = vpop.f32.mrb[0].mxu0
  %v1599 = vadd.f32 %v1530, %v1598
  %v1600 = vpop.f32.mrb[0].mxu0
  %1601 = vmatprep.mubr.f32.mxu0 0.0
  %1602 = vmatmul.mubr.f32.gmra.mrb[0].mxu0 %v1508
  %v1603 = vpop.f32.mrb[0].mxu0
  %v1604 = vadd.f32 %v1530, %v1603
  %v1605 = vpop.f32.mrb[0].mxu0
  %1606 = vdwg.mxu0
  %v1607 = vadd.f32 %v1353, %v1599
  %v1608 = vadd.f32 %v1354, %v1604
  %1609 = vst.msk [vmem:[%s14] sm:$0xff] %vm51, %v1607
  %1610 = vst.msk [vmem:[%s14 + $0x8] sm:$0xff] %vm51, %v1608
  // Predicated region
  $region58: #{transformer_model_reg_forward.5} parent=0 // pred_check
    _
  $region59: #{transformer_model_reg_forward.5} parent=0 // pred_check_branch
    %1612 = sbr.rel (0) target = $region61
  $region60: #{transformer_model_reg_forward.5} parent=0 // pred_region
    _
  $region61: #{transformer_model_reg_forward.5} parent=0 // pred_fallthru
    _
  // Predicated region
  $region62: #{transformer_model_reg_forward.5} parent=0 // pred_check
    _
  $region63: #{transformer_model_reg_forward.5} parent=0 // pred_check_branch
    %1614 = sbr.rel (0) target = $region65
  $region64: #{transformer_model_reg_forward.5} parent=0 // pred_region
    _
  $region65: #{transformer_model_reg_forward.5} parent=0 // pred_fallthru
    _

</llo_original>
